<compile_context>
chip_gen: v6e
topology: v6e:2x2x1
jax: 0.10.0
libtpu: 0.0.40
codegen_flags: <defaults>
</compile_context>

<pallas_src>
import functools

import jax
import jax.numpy as jnp
from jax.experimental import pallas as pl
from jax.experimental.pallas import tpu as pltpu

COMPLEXITY = 5          # DynamicEquationUnit default
LN_EPS = 1e-5           # nn.LayerNorm default eps
_GELU_C = 0.7978845608028654   # sqrt(2/pi)


def _round_up(x, m):
    return ((x + m - 1) // m) * m


def _base_func(i, t):
    """base_funcs[i % 7] from the torch module (only first `complexity` used)."""
    funcs = [
        jnp.sin,
        jnp.cos,
        jnp.tanh,
        lambda v: v * jax.nn.sigmoid(v),                       # SiLU
        lambda v: jnp.clip(v, 0.0, 6.0),                       # ReLU6
        lambda v: jax.nn.sigmoid(v) * v,                       # sigmoid(x)*x
        lambda v: 0.5 * v * (1.0 + jnp.tanh(_GELU_C * (v + 0.044715 * v ** 3))),
    ]
    return funcs[i % len(funcs)](t)


# ---------------------------------------------------------------------------
# Kernel
# ---------------------------------------------------------------------------
def evo_layer_kernel(x_ref, win_ref, bin_ref, gamma_ref, beta_ref,
                     coeff_ref, exp_ref, lnr_ref, lnb_ref,
                     wout_ref, bout_ref, umean_ref, o_ref,
                     *, complexity, term_dtype):
    f32 = jnp.float32
    x = x_ref[...]                                               # (bt, d_in)

    # ---- all units at once: input_layer, h is (bt, Np) ----
    h = jnp.dot(x, win_ref[...], preferred_element_type=f32) + bin_ref[...]

    # ---- per-unit LayerNorm (biased var, eps=1e-5), factorized reduce ----
    red = lnr_ref[...]                                           # (Np, Up): 1/d_int
    bc = lnb_ref[...]                                            # (Up, Np): 0/1
    mu_u = jnp.dot(h, red, preferred_element_type=f32)           # (bt, Up)
    mu = jnp.dot(mu_u, bc, preferred_element_type=f32)           # (bt, Np)
    cent = h - mu
    var_u = jnp.dot(cent * cent, red, preferred_element_type=f32)
    inv_u = jax.lax.rsqrt(var_u + LN_EPS)                        # tiny EUP tile
    inv = jnp.dot(inv_u, bc, preferred_element_type=f32)
    h = cent * inv
    h = h * gamma_ref[...] + beta_ref[...]
    h = jnp.maximum(h, 0.0)                                      # relu

    # ---- dynamic equation terms (complexity static -> Python unroll) ----
    # term_dtype = bf16 on v6e/v7x (bf16 VPU/EUP), f32 on v5e; dyn accumulates f32.
    ht = h.astype(term_dtype)
    exps = exp_ref[...].astype(term_dtype)                       # hoisted loads
    coeffs = coeff_ref[...].astype(term_dtype)
    dyn = jnp.zeros(h.shape, f32)
    for i in range(complexity):
        ti = jnp.clip(ht * exps[i:i + 1, :], -10.0, 10.0)
        term = coeffs[i:i + 1, :] * _base_func(i, ti)
        # nan_to_num elided: |ti| <= 10 keeps every base func finite, so the
        # torch nan_to_num is a provable no-op (this elision is tied to the clip).
        dyn = dyn + term.astype(f32)

    # ---- per-unit output projection (block-diag W_out) + per-unit clamp ----
    out_u = jnp.dot(dyn, wout_ref[...], preferred_element_type=f32) + bout_ref[...]
    out_u = jnp.clip(out_u, -100.0, 100.0)                       # (bt, Mp)

    # ---- mean over units (lane-dense d_out_pad) + final clamp ----
    o = jnp.dot(out_u, umean_ref[...], preferred_element_type=f32)
    o_ref[...] = jnp.clip(o, -100.0, 100.0)


# ---------------------------------------------------------------------------
# Host-side packing (do once per parameter set, NOT per forward call)
# ---------------------------------------------------------------------------
def pack_params(params):
    w_in, b_in, gamma, beta = (params["w_in"], params["b_in"],
                               params["gamma"], params["beta"])
    coeffs, exps, w_out, b_out = (params["coeffs"], params["exps"],
                                  params["w_out"], params["b_out"])
    U, d_in, d_int = w_in.shape
    d_out = w_out.shape[-1]
    C = coeffs.shape[1]
    N, M = U * d_int, U * d_out
    Np, Mp = _round_up(N, 128), _round_up(M, 128)
    Up = _round_up(U, 128)
    d_out_pad = _round_up(d_out, 128)
    f32 = jnp.float32

    def lane_pad(a, total):            # zero-pad the lane (last) axis
        return jnp.pad(a, ((0, 0), (0, total - a.shape[-1])))

    # units packed along the lane axis; pad lanes beyond N are all-zero
    w_in_p = lane_pad(jnp.transpose(w_in, (1, 0, 2)).reshape(d_in, N), Np)
    b_in_p = lane_pad(b_in.reshape(1, N), Np)
    gamma_p = lane_pad(gamma.reshape(1, N), Np)    # pad lanes: gamma=0, beta=0
    beta_p = lane_pad(beta.reshape(1, N), Np)
    coeffs_p = lane_pad(jnp.transpose(coeffs, (1, 0, 2)).reshape(C, N), Np)
    exps_p = lane_pad(jnp.transpose(exps, (1, 0, 2)).reshape(C, N), Np)

    # factorized per-unit LayerNorm: reduce (Np, Up) + broadcast (Up, Np)
    unit_of_lane = jnp.repeat(jnp.arange(U), d_int)                    # (N,)
    onehot = (unit_of_lane[:, None] == jnp.arange(Up)[None, :]).astype(f32)
    ln_red = jnp.pad(onehot / d_int, ((0, Np - N), (0, 0)))            # (Np, Up)
    ln_bcast = jnp.pad(onehot.T, ((0, 0), (0, Np - N)))                # (Up, Np)

    # block-diagonal output projection keeps the per-unit clip(-100,100) exact.
    # TODO(synk): for large U (>~8) switch the projection to a second
    # ("arbitrary") grid axis over units with per-unit (d_int, d_out) blocks
    # and a VMEM accumulator; the block-diag form is U^2*d_int*d_out elements.
    eye_u = jnp.eye(U, dtype=f32)
    w_out_b = jnp.einsum("uko,uv->ukvo", w_out, eye_u).reshape(N, M)
    w_out_b = jnp.pad(w_out_b, ((0, Np - N), (0, Mp - M)))             # (Np, Mp)
    b_out_p = lane_pad(b_out.reshape(1, M), Mp)

    # mean over units, zero-padded rows/cols for a lane-dense (x128) store
    umean = jnp.tile(jnp.eye(d_out, dtype=f32) / U, (U, 1))            # (M, d_out)
    umean = jnp.pad(umean, ((0, Mp - M), (0, d_out_pad - d_out)))

    arrays = (w_in_p, b_in_p, gamma_p, beta_p, coeffs_p, exps_p,
              ln_red, ln_bcast, w_out_b, b_out_p, umean)
    meta = dict(d_in=d_in, d_out=d_out, C=C, Np=Np, Mp=Mp, Up=Up,
                d_out_pad=d_out_pad)
    return dict(arrays=arrays, meta=meta)


# ---------------------------------------------------------------------------
# Wrapper
# ---------------------------------------------------------------------------
def _device_vmem_bytes():
    try:
        return int(pltpu.get_tpu_info().vmem_capacity_bytes)
    except Exception:
        return 64 << 20            # conservative (v7x-sized) fallback


def preferred_term_dtype():
    """bf16 term loop on bf16-VPU/EUP parts (v6e/v7x); f32 elsewhere (v5e)."""
    try:
        kind = jax.devices()[0].device_kind.lower()
    except Exception:
        return jnp.float32
    if any(tag in kind for tag in ("v6", "v7", "tpu7")):
        return jnp.bfloat16
    return jnp.float32


def evolving_equation_layer(x, packed, *, term_dtype=jnp.float32):
    """x: (B, d_in) f32; packed: result of pack_params()."""
    m = packed["meta"]
    d_in, d_out, C = m["d_in"], m["d_out"], m["C"]
    Np, Mp, Up, d_out_pad = m["Np"], m["Mp"], m["Up"], m["d_out_pad"]
    B = x.shape[0]

    vmem_cap = _device_vmem_bytes()
    # >= 2 "parallel" grid steps whenever the batch allows (both v7x TCs fed);
    # tile cap re-derived for the 64 MiB-VMEM part.
    bt_cap = 128 if vmem_cap <= (64 << 20) else 256
    if B <= 8:
        bt = 8
    else:
        bt = min(bt_cap, _round_up(pl.cdiv(B, 2), 8))
    B_pad = pl.cdiv(B, bt) * bt
    if B_pad != B:                       # non-multiple batch -> zero-pad rows
        x = jnp.pad(x, ((0, B_pad - B), (0, 0)))
    grid = (B_pad // bt,)

    # explicit scoped-VMEM limit sized from the chip (default 16/32 MiB limits
    # are too small once bt and N grow); <= 7/8 of physical capacity.
    vmem_limit = max(32 << 20, min(100 << 20, vmem_cap * 7 // 8))

    def run(single_buffer_weights):
        def const_spec(shape):
            if single_buffer_weights:
                return pl.BlockSpec(shape, lambda i: (0, 0),
                                    pipeline_mode=pl.Buffered(1))
            return pl.BlockSpec(shape, lambda i: (0, 0))

        in_specs = [
            pl.BlockSpec((bt, d_in), lambda i: (i, 0)),        # x (pipelined)
            const_spec((d_in, Np)),                            # W_in packed
            const_spec((1, Np)),                               # b_in
            const_spec((1, Np)),                               # gamma
            const_spec((1, Np)),                               # beta
            const_spec((C, Np)),                               # coeffs
            const_spec((C, Np)),                               # exponents
            const_spec((Np, Up)),                              # LN reduce
            const_spec((Up, Np)),                              # LN broadcast
            const_spec((Np, Mp)),                              # W_out block-diag
            const_spec((1, Mp)),                               # b_out
            const_spec((Mp, d_out_pad)),                       # unit mean
        ]
        grid_spec = pltpu.PrefetchScalarGridSpec(
            num_scalar_prefetch=0,
            grid=grid,
            in_specs=in_specs,
            out_specs=pl.BlockSpec((bt, d_out_pad), lambda i: (i, 0)),
        )
        out = pl.pallas_call(
            functools.partial(evo_layer_kernel, complexity=C,
                              term_dtype=term_dtype),
            out_shape=jax.ShapeDtypeStruct((B_pad, d_out_pad), jnp.float32),
            grid_spec=grid_spec,
            compiler_params=pltpu.CompilerParams(
                dimension_semantics=("parallel",),
                vmem_limit_bytes=vmem_limit),
        )(x, *packed["arrays"])
        return jax.block_until_ready(out)

    try:
        out = run(True)
    except Exception:
        # TODO(synk): this jax build rejected pl.Buffered(1) single-buffering;
        # fall back to default double-buffered weight blocks.
        out = run(False)

    return out[:B, :d_out]


# ---------------------------------------------------------------------------
# Parameter init (mirrors the torch module) and pure-JAX reference
# ---------------------------------------------------------------------------
def init_params(key, num_units, d_in, d_out):
    d_int = max(d_out, COMPLEXITY, d_in // 2 + 1)

    def xavier(k, fan_in, fan_out, shape):
        bound = jnp.sqrt(6.0 / (fan_in + fan_out))
        return jax.random.uniform(k, shape, jnp.float32, -bound, bound)

    keys = jax.random.split(key, 4)
    w_in = xavier(keys[0], d_in, d_int, (num_units, d_in, d_int))
    w_out = xavier(keys[1], d_int, d_out, (num_units, d_int, d_out))
    coeffs = jax.random.normal(keys[2], (num_units, COMPLEXITY, d_int),
                               jnp.float32) * 0.05
    exps = jax.random.uniform(keys[3], (num_units, COMPLEXITY, d_int),
                              jnp.float32) * 1.5 + 0.25
    return dict(
        w_in=w_in,
        b_in=jnp.zeros((num_units, d_int), jnp.float32),
        gamma=jnp.ones((num_units, d_int), jnp.float32),
        beta=jnp.zeros((num_units, d_int), jnp.float32),
        coeffs=coeffs,
        exps=exps,
        w_out=w_out,
        b_out=jnp.zeros((num_units, d_out), jnp.float32),
    ), d_int


def reference_forward(x, params):
    """Pure-JAX reference of the torch forward (sanity check)."""
    outs = []
    U = params["w_in"].shape[0]
    for u in range(U):
        h = x @ params["w_in"][u] + params["b_in"][u]
        mu = h.mean(-1, keepdims=True)
        var = ((h - mu) ** 2).mean(-1, keepdims=True)
        h = (h - mu) / jnp.sqrt(var + LN_EPS)
        h = h * params["gamma"][u] + params["beta"][u]
        h = jnp.maximum(h, 0.0)
        dyn = jnp.zeros_like(h)
        for i in range(COMPLEXITY):
            ti = jnp.clip(h * params["exps"][u, i][None, :], -10.0, 10.0)
            term = params["coeffs"][u, i][None, :] * _base_func(i, ti)
            dyn = dyn + jnp.nan_to_num(term, nan=0.0, posinf=1e4, neginf=-1e4)
        o = dyn @ params["w_out"][u] + params["b_out"][u]
        outs.append(jnp.clip(o, -100.0, 100.0))
    # TODO(synk): torch filters non-finite unit outputs at runtime; with finite
    # params all outputs are finite so the filter is a no-op here and in the
    # kernel (per-unit clip before the unit mean is preserved exactly).
    return jnp.clip(jnp.stack(outs).mean(0), -100.0, 100.0)


if __name__ == "__main__":
    B, D_IN, D_OUT, UNITS = 8, 32, 32, 2
    key = jax.random.PRNGKey(0)
    kx, kp = jax.random.split(key)
    params, d_int = init_params(kp, UNITS, D_IN, D_OUT)
    x = jax.random.normal(kx, (B, D_IN), jnp.float32)

    packed = pack_params(params)          # host-side packing, done once
    ref = reference_forward(x, params)

    # exact-semantics path (f32 term loop) -> tight tolerance
    out = jax.block_until_ready(
        evolving_equation_layer(x, packed, term_dtype=jnp.float32))
    assert out.shape == (B, D_OUT)
    assert jnp.allclose(out, ref, atol=5e-4, rtol=5e-4), "f32 mismatch vs reference"

    # fast path for this chip (bf16 term loop on v6e/v7x; f32 => already tested)
    td = preferred_term_dtype()
    if td != jnp.float32:
        out_fast = jax.block_until_ready(
            evolving_equation_layer(x, packed, term_dtype=td))
        assert jnp.allclose(out_fast, ref, atol=3e-2, rtol=3e-2), \
            "bf16 term-loop mismatch vs reference"

    print("KERNEL_OK")
</pallas_src>

<mosaic_0001>
module attributes {stable_mosaic.version = 11 : i64} {
  func.func @evo_layer_kernel(%arg0: i32, %arg1: memref<8x32xf32, #tpu.memory_space<vmem>>, %arg2: memref<32x128xf32, #tpu.memory_space<vmem>>, %arg3: memref<1x128xf32, #tpu.memory_space<vmem>>, %arg4: memref<1x128xf32, #tpu.memory_space<vmem>>, %arg5: memref<1x128xf32, #tpu.memory_space<vmem>>, %arg6: memref<5x128xf32, #tpu.memory_space<vmem>>, %arg7: memref<5x128xf32, #tpu.memory_space<vmem>>, %arg8: memref<128x128xf32, #tpu.memory_space<vmem>>, %arg9: memref<128x128xf32, #tpu.memory_space<vmem>>, %arg10: memref<128x128xf32, #tpu.memory_space<vmem>>, %arg11: memref<1x128xf32, #tpu.memory_space<vmem>>, %arg12: memref<128x128xf32, #tpu.memory_space<vmem>>, %arg13: memref<8x128xf32, #tpu.memory_space<vmem>>) attributes {dimension_semantics = [#tpu.dimension_semantics<parallel>], iteration_bounds = array<i64: 1>, scalar_prefetch = 0 : i64, scratch_operands = 0 : i64, tpu.core_type = #tpu.core_type<tc>, window_params = [{transform_indices = @transform_0, window_bounds = array<i64: 8, 32>}, {pipeline_mode = #tpu.pipeline_mode<synchronous>, transform_indices = @transform_1, window_bounds = array<i64: 32, 128>}, {pipeline_mode = #tpu.pipeline_mode<synchronous>, transform_indices = @transform_2, window_bounds = array<i64: 1, 128>}, {pipeline_mode = #tpu.pipeline_mode<synchronous>, transform_indices = @transform_3, window_bounds = array<i64: 1, 128>}, {pipeline_mode = #tpu.pipeline_mode<synchronous>, transform_indices = @transform_4, window_bounds = array<i64: 1, 128>}, {pipeline_mode = #tpu.pipeline_mode<synchronous>, transform_indices = @transform_5, window_bounds = array<i64: 5, 128>}, {pipeline_mode = #tpu.pipeline_mode<synchronous>, transform_indices = @transform_6, window_bounds = array<i64: 5, 128>}, {pipeline_mode = #tpu.pipeline_mode<synchronous>, transform_indices = @transform_7, window_bounds = array<i64: 128, 128>}, {pipeline_mode = #tpu.pipeline_mode<synchronous>, transform_indices = @transform_8, window_bounds = array<i64: 128, 128>}, {pipeline_mode = #tpu.pipeline_mode<synchronous>, transform_indices = @transform_9, window_bounds = array<i64: 128, 128>}, {pipeline_mode = #tpu.pipeline_mode<synchronous>, transform_indices = @transform_10, window_bounds = array<i64: 1, 128>}, {pipeline_mode = #tpu.pipeline_mode<synchronous>, transform_indices = @transform_11, window_bounds = array<i64: 128, 128>}, {transform_indices = @transform_12, window_bounds = array<i64: 8, 128>}]} {
    %c0 = arith.constant 0 : index
    %c0_0 = arith.constant 0 : index
    %0 = vector.load %arg1[%c0, %c0_0] : memref<8x32xf32, #tpu.memory_space<vmem>>, vector<8x32xf32>
    %c0_1 = arith.constant 0 : index
    %c0_2 = arith.constant 0 : index
    %1 = vector.load %arg2[%c0_1, %c0_2] : memref<32x128xf32, #tpu.memory_space<vmem>>, vector<32x128xf32>
    %cst = arith.constant dense<0.000000e+00> : vector<8x128xf32>
    %2 = tpu.matmul %0, %1, %cst {dimension_numbers = #tpu.dot_dimension_numbers<[1], [0], [0], [1], [0, 0, 1, 1], [], []>} : vector<8x32xf32>, vector<32x128xf32>, vector<8x128xf32> -> vector<8x128xf32>
    %c0_3 = arith.constant 0 : index
    %c0_4 = arith.constant 0 : index
    %3 = vector.load %arg3[%c0_3, %c0_4] : memref<1x128xf32, #tpu.memory_space<vmem>>, vector<1x128xf32>
    %4 = vector.broadcast %3 : vector<1x128xf32> to vector<8x128xf32>
    %5 = arith.addf %2, %4 : vector<8x128xf32>
    %c0_5 = arith.constant 0 : index
    %c0_6 = arith.constant 0 : index
    %6 = vector.load %arg8[%c0_5, %c0_6] : memref<128x128xf32, #tpu.memory_space<vmem>>, vector<128x128xf32>
    %c0_7 = arith.constant 0 : index
    %c0_8 = arith.constant 0 : index
    %7 = vector.load %arg9[%c0_7, %c0_8] : memref<128x128xf32, #tpu.memory_space<vmem>>, vector<128x128xf32>
    %cst_9 = arith.constant dense<0.000000e+00> : vector<8x128xf32>
    %8 = tpu.matmul %5, %6, %cst_9 {dimension_numbers = #tpu.dot_dimension_numbers<[1], [0], [0], [1], [0, 0, 1, 1], [], []>} : vector<8x128xf32>, vector<128x128xf32>, vector<8x128xf32> -> vector<8x128xf32>
    %cst_10 = arith.constant dense<0.000000e+00> : vector<8x128xf32>
    %9 = tpu.matmul %8, %7, %cst_10 {dimension_numbers = #tpu.dot_dimension_numbers<[1], [0], [0], [1], [0, 0, 1, 1], [], []>} : vector<8x128xf32>, vector<128x128xf32>, vector<8x128xf32> -> vector<8x128xf32>
    %10 = arith.subf %5, %9 : vector<8x128xf32>
    %11 = arith.mulf %10, %10 : vector<8x128xf32>
    %cst_11 = arith.constant dense<0.000000e+00> : vector<8x128xf32>
    %12 = tpu.matmul %11, %6, %cst_11 {dimension_numbers = #tpu.dot_dimension_numbers<[1], [0], [0], [1], [0, 0, 1, 1], [], []>} : vector<8x128xf32>, vector<128x128xf32>, vector<8x128xf32> -> vector<8x128xf32>
    %cst_12 = arith.constant 9.99999974E-6 : f32
    %13 = vector.broadcast %cst_12 : f32 to vector<8x128xf32>
    %14 = arith.addf %12, %13 : vector<8x128xf32>
    %15 = math.rsqrt %14 : vector<8x128xf32>
    %cst_13 = arith.constant dense<0.000000e+00> : vector<8x128xf32>
    %16 = tpu.matmul %15, %7, %cst_13 {dimension_numbers = #tpu.dot_dimension_numbers<[1], [0], [0], [1], [0, 0, 1, 1], [], []>} : vector<8x128xf32>, vector<128x128xf32>, vector<8x128xf32> -> vector<8x128xf32>
    %17 = arith.mulf %10, %16 : vector<8x128xf32>
    %c0_14 = arith.constant 0 : index
    %c0_15 = arith.constant 0 : index
    %18 = vector.load %arg4[%c0_14, %c0_15] : memref<1x128xf32, #tpu.memory_space<vmem>>, vector<1x128xf32>
    %19 = vector.broadcast %18 : vector<1x128xf32> to vector<8x128xf32>
    %20 = arith.mulf %17, %19 : vector<8x128xf32>
    %c0_16 = arith.constant 0 : index
    %c0_17 = arith.constant 0 : index
    %21 = vector.load %arg5[%c0_16, %c0_17] : memref<1x128xf32, #tpu.memory_space<vmem>>, vector<1x128xf32>
    %22 = vector.broadcast %21 : vector<1x128xf32> to vector<8x128xf32>
    %23 = arith.addf %20, %22 : vector<8x128xf32>
    %cst_18 = arith.constant 0.000000e+00 : f32
    %24 = vector.broadcast %cst_18 : f32 to vector<8x128xf32>
    %25 = arith.maximumf %23, %24 : vector<8x128xf32>
    %c0_19 = arith.constant 0 : index
    %c0_20 = arith.constant 0 : index
    %26 = vector.load %arg7[%c0_19, %c0_20] : memref<5x128xf32, #tpu.memory_space<vmem>>, vector<5x128xf32>
    %c0_21 = arith.constant 0 : index
    %c0_22 = arith.constant 0 : index
    %27 = vector.load %arg6[%c0_21, %c0_22] : memref<5x128xf32, #tpu.memory_space<vmem>>, vector<5x128xf32>
    %cst_23 = arith.constant 0.000000e+00 : f32
    %28 = vector.broadcast %cst_23 : f32 to vector<8x128xf32>
    %29 = vector.extract_strided_slice %26 {offsets = [0, 0], sizes = [1, 128], strides = [1, 1]} : vector<5x128xf32> to vector<1x128xf32>
    %30 = vector.broadcast %29 : vector<1x128xf32> to vector<8x128xf32>
    %31 = arith.mulf %25, %30 : vector<8x128xf32>
    %cst_24 = arith.constant -1.000000e+01 : f32
    %cst_25 = arith.constant 1.000000e+01 : f32
    %32 = vector.broadcast %cst_24 : f32 to vector<8x128xf32>
    %33 = arith.maximumf %32, %31 : vector<8x128xf32>
    %34 = vector.broadcast %cst_25 : f32 to vector<8x128xf32>
    %35 = arith.minimumf %34, %33 : vector<8x128xf32>
    %36 = vector.extract_strided_slice %27 {offsets = [0, 0], sizes = [1, 128], strides = [1, 1]} : vector<5x128xf32> to vector<1x128xf32>
    %37 = math.sin %35 : vector<8x128xf32>
    %38 = vector.broadcast %36 : vector<1x128xf32> to vector<8x128xf32>
    %39 = arith.mulf %38, %37 : vector<8x128xf32>
    %40 = arith.addf %28, %39 : vector<8x128xf32>
    %41 = vector.extract_strided_slice %26 {offsets = [1, 0], sizes = [1, 128], strides = [1, 1]} : vector<5x128xf32> to vector<1x128xf32>
    %42 = vector.broadcast %41 : vector<1x128xf32> to vector<8x128xf32>
    %43 = arith.mulf %25, %42 : vector<8x128xf32>
    %cst_26 = arith.constant -1.000000e+01 : f32
    %cst_27 = arith.constant 1.000000e+01 : f32
    %44 = vector.broadcast %cst_26 : f32 to vector<8x128xf32>
    %45 = arith.maximumf %44, %43 : vector<8x128xf32>
    %46 = vector.broadcast %cst_27 : f32 to vector<8x128xf32>
    %47 = arith.minimumf %46, %45 : vector<8x128xf32>
    %48 = vector.extract_strided_slice %27 {offsets = [1, 0], sizes = [1, 128], strides = [1, 1]} : vector<5x128xf32> to vector<1x128xf32>
    %49 = math.cos %47 : vector<8x128xf32>
    %50 = vector.broadcast %48 : vector<1x128xf32> to vector<8x128xf32>
    %51 = arith.mulf %50, %49 : vector<8x128xf32>
    %52 = arith.addf %40, %51 : vector<8x128xf32>
    %53 = vector.extract_strided_slice %26 {offsets = [2, 0], sizes = [1, 128], strides = [1, 1]} : vector<5x128xf32> to vector<1x128xf32>
    %54 = vector.broadcast %53 : vector<1x128xf32> to vector<8x128xf32>
    %55 = arith.mulf %25, %54 : vector<8x128xf32>
    %cst_28 = arith.constant -1.000000e+01 : f32
    %cst_29 = arith.constant 1.000000e+01 : f32
    %56 = vector.broadcast %cst_28 : f32 to vector<8x128xf32>
    %57 = arith.maximumf %56, %55 : vector<8x128xf32>
    %58 = vector.broadcast %cst_29 : f32 to vector<8x128xf32>
    %59 = arith.minimumf %58, %57 : vector<8x128xf32>
    %60 = vector.extract_strided_slice %27 {offsets = [2, 0], sizes = [1, 128], strides = [1, 1]} : vector<5x128xf32> to vector<1x128xf32>
    %61 = math.tanh %59 : vector<8x128xf32>
    %62 = vector.broadcast %60 : vector<1x128xf32> to vector<8x128xf32>
    %63 = arith.mulf %62, %61 : vector<8x128xf32>
    %64 = arith.addf %52, %63 : vector<8x128xf32>
    %65 = vector.extract_strided_slice %26 {offsets = [3, 0], sizes = [1, 128], strides = [1, 1]} : vector<5x128xf32> to vector<1x128xf32>
    %66 = vector.broadcast %65 : vector<1x128xf32> to vector<8x128xf32>
    %67 = arith.mulf %25, %66 : vector<8x128xf32>
    %cst_30 = arith.constant -1.000000e+01 : f32
    %cst_31 = arith.constant 1.000000e+01 : f32
    %68 = vector.broadcast %cst_30 : f32 to vector<8x128xf32>
    %69 = arith.maximumf %68, %67 : vector<8x128xf32>
    %70 = vector.broadcast %cst_31 : f32 to vector<8x128xf32>
    %71 = arith.minimumf %70, %69 : vector<8x128xf32>
    %72 = vector.extract_strided_slice %27 {offsets = [3, 0], sizes = [1, 128], strides = [1, 1]} : vector<5x128xf32> to vector<1x128xf32>
    %73 = arith.negf %71 : vector<8x128xf32>
    %74 = math.exp %73 : vector<8x128xf32>
    %cst_32 = arith.constant 1.000000e+00 : f32
    %75 = vector.broadcast %cst_32 : f32 to vector<8x128xf32>
    %76 = arith.addf %75, %74 : vector<8x128xf32>
    %77 = arith.divf %75, %76 : vector<8x128xf32>
    %78 = arith.mulf %71, %77 : vector<8x128xf32>
    %79 = vector.broadcast %72 : vector<1x128xf32> to vector<8x128xf32>
    %80 = arith.mulf %79, %78 : vector<8x128xf32>
    %81 = arith.addf %64, %80 : vector<8x128xf32>
    %82 = vector.extract_strided_slice %26 {offsets = [4, 0], sizes = [1, 128], strides = [1, 1]} : vector<5x128xf32> to vector<1x128xf32>
    %83 = vector.broadcast %82 : vector<1x128xf32> to vector<8x128xf32>
    %84 = arith.mulf %25, %83 : vector<8x128xf32>
    %cst_33 = arith.constant -1.000000e+01 : f32
    %cst_34 = arith.constant 1.000000e+01 : f32
    %85 = vector.broadcast %cst_33 : f32 to vector<8x128xf32>
    %86 = arith.maximumf %85, %84 : vector<8x128xf32>
    %87 = vector.broadcast %cst_34 : f32 to vector<8x128xf32>
    %88 = arith.minimumf %87, %86 : vector<8x128xf32>
    %89 = vector.extract_strided_slice %27 {offsets = [4, 0], sizes = [1, 128], strides = [1, 1]} : vector<5x128xf32> to vector<1x128xf32>
    %cst_35 = arith.constant 0.000000e+00 : f32
    %cst_36 = arith.constant 6.000000e+00 : f32
    %90 = vector.broadcast %cst_35 : f32 to vector<8x128xf32>
    %91 = arith.maximumf %90, %88 : vector<8x128xf32>
    %92 = vector.broadcast %cst_36 : f32 to vector<8x128xf32>
    %93 = arith.minimumf %92, %91 : vector<8x128xf32>
    %94 = vector.broadcast %89 : vector<1x128xf32> to vector<8x128xf32>
    %95 = arith.mulf %94, %93 : vector<8x128xf32>
    %96 = arith.addf %81, %95 : vector<8x128xf32>
    %c0_37 = arith.constant 0 : index
    %c0_38 = arith.constant 0 : index
    %97 = vector.load %arg10[%c0_37, %c0_38] : memref<128x128xf32, #tpu.memory_space<vmem>>, vector<128x128xf32>
    %cst_39 = arith.constant dense<0.000000e+00> : vector<8x128xf32>
    %98 = tpu.matmul %96, %97, %cst_39 {dimension_numbers = #tpu.dot_dimension_numbers<[1], [0], [0], [1], [0, 0, 1, 1], [], []>} : vector<8x128xf32>, vector<128x128xf32>, vector<8x128xf32> -> vector<8x128xf32>
    %c0_40 = arith.constant 0 : index
    %c0_41 = arith.constant 0 : index
    %99 = vector.load %arg11[%c0_40, %c0_41] : memref<1x128xf32, #tpu.memory_space<vmem>>, vector<1x128xf32>
    %100 = vector.broadcast %99 : vector<1x128xf32> to vector<8x128xf32>
    %101 = arith.addf %98, %100 : vector<8x128xf32>
    %cst_42 = arith.constant -1.000000e+02 : f32
    %cst_43 = arith.constant 1.000000e+02 : f32
    %102 = vector.broadcast %cst_42 : f32 to vector<8x128xf32>
    %103 = arith.maximumf %102, %101 : vector<8x128xf32>
    %104 = vector.broadcast %cst_43 : f32 to vector<8x128xf32>
    %105 = arith.minimumf %104, %103 : vector<8x128xf32>
    %c0_44 = arith.constant 0 : index
    %c0_45 = arith.constant 0 : index
    %106 = vector.load %arg12[%c0_44, %c0_45] : memref<128x128xf32, #tpu.memory_space<vmem>>, vector<128x128xf32>
    %cst_46 = arith.constant dense<0.000000e+00> : vector<8x128xf32>
    %107 = tpu.matmul %105, %106, %cst_46 {dimension_numbers = #tpu.dot_dimension_numbers<[1], [0], [0], [1], [0, 0, 1, 1], [], []>} : vector<8x128xf32>, vector<128x128xf32>, vector<8x128xf32> -> vector<8x128xf32>
    %cst_47 = arith.constant -1.000000e+02 : f32
    %cst_48 = arith.constant 1.000000e+02 : f32
    %108 = vector.broadcast %cst_47 : f32 to vector<8x128xf32>
    %109 = arith.maximumf %108, %107 : vector<8x128xf32>
    %110 = vector.broadcast %cst_48 : f32 to vector<8x128xf32>
    %111 = arith.minimumf %110, %109 : vector<8x128xf32>
    %c0_49 = arith.constant 0 : index
    %c0_50 = arith.constant 0 : index
    %112 = vector.load %arg13[%c0_49, %c0_50] : memref<8x128xf32, #tpu.memory_space<vmem>>, vector<8x128xf32>
    tpu.vector_store %arg13[%c0_49, %c0_50], %111 {strides = array<i32>} : memref<8x128xf32, #tpu.memory_space<vmem>>, vector<8x128xf32>,
    return
  }
  func.func @transform_0(%arg0: i32) -> (i32, i32) {
    %c0_i32 = arith.constant 0 : i32
    %c0_i32_0 = arith.constant 0 : i32
    return %arg0, %c0_i32 : i32, i32
  }
  func.func @transform_1(%arg0: i32) -> (i32, i32) {
    %c0_i32 = arith.constant 0 : i32
    %c0_i32_0 = arith.constant 0 : i32
    %c0_i32_1 = arith.constant 0 : i32
    return %c0_i32, %c0_i32_0 : i32, i32
  }
  func.func @transform_2(%arg0: i32) -> (i32, i32) {
    %c0_i32 = arith.constant 0 : i32
    %c0_i32_0 = arith.constant 0 : i32
    %c0_i32_1 = arith.constant 0 : i32
    return %c0_i32, %c0_i32_0 : i32, i32
  }
  func.func @transform_3(%arg0: i32) -> (i32, i32) {
    %c0_i32 = arith.constant 0 : i32
    %c0_i32_0 = arith.constant 0 : i32
    %c0_i32_1 = arith.constant 0 : i32
    return %c0_i32, %c0_i32_0 : i32, i32
  }
  func.func @transform_4(%arg0: i32) -> (i32, i32) {
    %c0_i32 = arith.constant 0 : i32
    %c0_i32_0 = arith.constant 0 : i32
    %c0_i32_1 = arith.constant 0 : i32
    return %c0_i32, %c0_i32_0 : i32, i32
  }
  func.func @transform_5(%arg0: i32) -> (i32, i32) {
    %c0_i32 = arith.constant 0 : i32
    %c0_i32_0 = arith.constant 0 : i32
    %c0_i32_1 = arith.constant 0 : i32
    return %c0_i32, %c0_i32_0 : i32, i32
  }
  func.func @transform_6(%arg0: i32) -> (i32, i32) {
    %c0_i32 = arith.constant 0 : i32
    %c0_i32_0 = arith.constant 0 : i32
    %c0_i32_1 = arith.constant 0 : i32
    return %c0_i32, %c0_i32_0 : i32, i32
  }
  func.func @transform_7(%arg0: i32) -> (i32, i32) {
    %c0_i32 = arith.constant 0 : i32
    %c0_i32_0 = arith.constant 0 : i32
    %c0_i32_1 = arith.constant 0 : i32
    return %c0_i32, %c0_i32_0 : i32, i32
  }
  func.func @transform_8(%arg0: i32) -> (i32, i32) {
    %c0_i32 = arith.constant 0 : i32
    %c0_i32_0 = arith.constant 0 : i32
    %c0_i32_1 = arith.constant 0 : i32
    return %c0_i32, %c0_i32_0 : i32, i32
  }
  func.func @transform_9(%arg0: i32) -> (i32, i32) {
    %c0_i32 = arith.constant 0 : i32
    %c0_i32_0 = arith.constant 0 : i32
    %c0_i32_1 = arith.constant 0 : i32
    return %c0_i32, %c0_i32_0 : i32, i32
  }
  func.func @transform_10(%arg0: i32) -> (i32, i32) {
    %c0_i32 = arith.constant 0 : i32
    %c0_i32_0 = arith.constant 0 : i32
    %c0_i32_1 = arith.constant 0 : i32
    return %c0_i32, %c0_i32_0 : i32, i32
  }
  func.func @transform_11(%arg0: i32) -> (i32, i32) {
    %c0_i32 = arith.constant 0 : i32
    %c0_i32_0 = arith.constant 0 : i32
    %c0_i32_1 = arith.constant 0 : i32
    return %c0_i32, %c0_i32_0 : i32, i32
  }
  func.func @transform_12(%arg0: i32) -> (i32, i32) {
    %c0_i32 = arith.constant 0 : i32
    %c0_i32_0 = arith.constant 0 : i32
    return %arg0, %c0_i32 : i32, i32
  }
}

module attributes {stable_mosaic.version = 11 : i64} {
  func.func @evo_layer_kernel(%arg0: i32, %arg1: memref<8x32xf32, #tpu.memory_space<vmem>>, %arg2: memref<32x128xf32, #tpu.memory_space<vmem>>, %arg3: memref<1x128xf32, #tpu.memory_space<vmem>>, %arg4: memref<1x128xf32, #tpu.memory_space<vmem>>, %arg5: memref<1x128xf32, #tpu.memory_space<vmem>>, %arg6: memref<5x128xf32, #tpu.memory_space<vmem>>, %arg7: memref<5x128xf32, #tpu.memory_space<vmem>>, %arg8: memref<128x128xf32, #tpu.memory_space<vmem>>, %arg9: memref<128x128xf32, #tpu.memory_space<vmem>>, %arg10: memref<128x128xf32, #tpu.memory_space<vmem>>, %arg11: memref<1x128xf32, #tpu.memory_space<vmem>>, %arg12: memref<128x128xf32, #tpu.memory_space<vmem>>, %arg13: memref<8x128xf32, #tpu.memory_space<vmem>>) attributes {dimension_semantics = [#tpu.dimension_semantics<parallel>], iteration_bounds = array<i64: 1>, scalar_prefetch = 0 : i64, scratch_operands = 0 : i64, tpu.core_type = #tpu.core_type<tc>, window_params = [{transform_indices = @transform_0, window_bounds = array<i64: 8, 32>}, {pipeline_mode = #tpu.pipeline_mode<synchronous>, transform_indices = @transform_1, window_bounds = array<i64: 32, 128>}, {pipeline_mode = #tpu.pipeline_mode<synchronous>, transform_indices = @transform_2, window_bounds = array<i64: 1, 128>}, {pipeline_mode = #tpu.pipeline_mode<synchronous>, transform_indices = @transform_3, window_bounds = array<i64: 1, 128>}, {pipeline_mode = #tpu.pipeline_mode<synchronous>, transform_indices = @transform_4, window_bounds = array<i64: 1, 128>}, {pipeline_mode = #tpu.pipeline_mode<synchronous>, transform_indices = @transform_5, window_bounds = array<i64: 5, 128>}, {pipeline_mode = #tpu.pipeline_mode<synchronous>, transform_indices = @transform_6, window_bounds = array<i64: 5, 128>}, {pipeline_mode = #tpu.pipeline_mode<synchronous>, transform_indices = @transform_7, window_bounds = array<i64: 128, 128>}, {pipeline_mode = #tpu.pipeline_mode<synchronous>, transform_indices = @transform_8, window_bounds = array<i64: 128, 128>}, {pipeline_mode = #tpu.pipeline_mode<synchronous>, transform_indices = @transform_9, window_bounds = array<i64: 128, 128>}, {pipeline_mode = #tpu.pipeline_mode<synchronous>, transform_indices = @transform_10, window_bounds = array<i64: 1, 128>}, {pipeline_mode = #tpu.pipeline_mode<synchronous>, transform_indices = @transform_11, window_bounds = array<i64: 128, 128>}, {transform_indices = @transform_12, window_bounds = array<i64: 8, 128>}]} {
    %c0 = arith.constant 0 : index
    %c0_0 = arith.constant 0 : index
    %0 = vector.load %arg1[%c0, %c0_0] : memref<8x32xf32, #tpu.memory_space<vmem>>, vector<8x32xf32>
    %c0_1 = arith.constant 0 : index
    %c0_2 = arith.constant 0 : index
    %1 = vector.load %arg2[%c0_1, %c0_2] : memref<32x128xf32, #tpu.memory_space<vmem>>, vector<32x128xf32>
    %cst = arith.constant dense<0.000000e+00> : vector<8x128xf32>
    %2 = tpu.matmul %0, %1, %cst {dimension_numbers = #tpu.dot_dimension_numbers<[1], [0], [0], [1], [0, 0, 1, 1], [], []>} : vector<8x32xf32>, vector<32x128xf32>, vector<8x128xf32> -> vector<8x128xf32>
    %c0_3 = arith.constant 0 : index
    %c0_4 = arith.constant 0 : index
    %3 = vector.load %arg3[%c0_3, %c0_4] : memref<1x128xf32, #tpu.memory_space<vmem>>, vector<1x128xf32>
    %4 = vector.broadcast %3 : vector<1x128xf32> to vector<8x128xf32>
    %5 = arith.addf %2, %4 : vector<8x128xf32>
    %c0_5 = arith.constant 0 : index
    %c0_6 = arith.constant 0 : index
    %6 = vector.load %arg8[%c0_5, %c0_6] : memref<128x128xf32, #tpu.memory_space<vmem>>, vector<128x128xf32>
    %c0_7 = arith.constant 0 : index
    %c0_8 = arith.constant 0 : index
    %7 = vector.load %arg9[%c0_7, %c0_8] : memref<128x128xf32, #tpu.memory_space<vmem>>, vector<128x128xf32>
    %cst_9 = arith.constant dense<0.000000e+00> : vector<8x128xf32>
    %8 = tpu.matmul %5, %6, %cst_9 {dimension_numbers = #tpu.dot_dimension_numbers<[1], [0], [0], [1], [0, 0, 1, 1], [], []>} : vector<8x128xf32>, vector<128x128xf32>, vector<8x128xf32> -> vector<8x128xf32>
    %cst_10 = arith.constant dense<0.000000e+00> : vector<8x128xf32>
    %9 = tpu.matmul %8, %7, %cst_10 {dimension_numbers = #tpu.dot_dimension_numbers<[1], [0], [0], [1], [0, 0, 1, 1], [], []>} : vector<8x128xf32>, vector<128x128xf32>, vector<8x128xf32> -> vector<8x128xf32>
    %10 = arith.subf %5, %9 : vector<8x128xf32>
    %11 = arith.mulf %10, %10 : vector<8x128xf32>
    %cst_11 = arith.constant dense<0.000000e+00> : vector<8x128xf32>
    %12 = tpu.matmul %11, %6, %cst_11 {dimension_numbers = #tpu.dot_dimension_numbers<[1], [0], [0], [1], [0, 0, 1, 1], [], []>} : vector<8x128xf32>, vector<128x128xf32>, vector<8x128xf32> -> vector<8x128xf32>
    %cst_12 = arith.constant 9.99999974E-6 : f32
    %13 = vector.broadcast %cst_12 : f32 to vector<8x128xf32>
    %14 = arith.addf %12, %13 : vector<8x128xf32>
    %15 = math.rsqrt %14 : vector<8x128xf32>
    %cst_13 = arith.constant dense<0.000000e+00> : vector<8x128xf32>
    %16 = tpu.matmul %15, %7, %cst_13 {dimension_numbers = #tpu.dot_dimension_numbers<[1], [0], [0], [1], [0, 0, 1, 1], [], []>} : vector<8x128xf32>, vector<128x128xf32>, vector<8x128xf32> -> vector<8x128xf32>
    %17 = arith.mulf %10, %16 : vector<8x128xf32>
    %c0_14 = arith.constant 0 : index
    %c0_15 = arith.constant 0 : index
    %18 = vector.load %arg4[%c0_14, %c0_15] : memref<1x128xf32, #tpu.memory_space<vmem>>, vector<1x128xf32>
    %19 = vector.broadcast %18 : vector<1x128xf32> to vector<8x128xf32>
    %20 = arith.mulf %17, %19 : vector<8x128xf32>
    %c0_16 = arith.constant 0 : index
    %c0_17 = arith.constant 0 : index
    %21 = vector.load %arg5[%c0_16, %c0_17] : memref<1x128xf32, #tpu.memory_space<vmem>>, vector<1x128xf32>
    %22 = vector.broadcast %21 : vector<1x128xf32> to vector<8x128xf32>
    %23 = arith.addf %20, %22 : vector<8x128xf32>
    %cst_18 = arith.constant 0.000000e+00 : f32
    %24 = vector.broadcast %cst_18 : f32 to vector<8x128xf32>
    %25 = arith.maximumf %23, %24 : vector<8x128xf32>
    %c0_19 = arith.constant 0 : index
    %c0_20 = arith.constant 0 : index
    %26 = vector.load %arg7[%c0_19, %c0_20] : memref<5x128xf32, #tpu.memory_space<vmem>>, vector<5x128xf32>
    %c0_21 = arith.constant 0 : index
    %c0_22 = arith.constant 0 : index
    %27 = vector.load %arg6[%c0_21, %c0_22] : memref<5x128xf32, #tpu.memory_space<vmem>>, vector<5x128xf32>
    %cst_23 = arith.constant 0.000000e+00 : f32
    %28 = vector.broadcast %cst_23 : f32 to vector<8x128xf32>
    %29 = vector.extract_strided_slice %26 {offsets = [0, 0], sizes = [1, 128], strides = [1, 1]} : vector<5x128xf32> to vector<1x128xf32>
    %30 = vector.broadcast %29 : vector<1x128xf32> to vector<8x128xf32>
    %31 = arith.mulf %25, %30 : vector<8x128xf32>
    %cst_24 = arith.constant -1.000000e+01 : f32
    %cst_25 = arith.constant 1.000000e+01 : f32
    %32 = vector.broadcast %cst_24 : f32 to vector<8x128xf32>
    %33 = arith.maximumf %32, %31 : vector<8x128xf32>
    %34 = vector.broadcast %cst_25 : f32 to vector<8x128xf32>
    %35 = arith.minimumf %34, %33 : vector<8x128xf32>
    %36 = vector.extract_strided_slice %27 {offsets = [0, 0], sizes = [1, 128], strides = [1, 1]} : vector<5x128xf32> to vector<1x128xf32>
    %37 = math.sin %35 : vector<8x128xf32>
    %38 = vector.broadcast %36 : vector<1x128xf32> to vector<8x128xf32>
    %39 = arith.mulf %38, %37 : vector<8x128xf32>
    %40 = arith.addf %28, %39 : vector<8x128xf32>
    %41 = vector.extract_strided_slice %26 {offsets = [1, 0], sizes = [1, 128], strides = [1, 1]} : vector<5x128xf32> to vector<1x128xf32>
    %42 = vector.broadcast %41 : vector<1x128xf32> to vector<8x128xf32>
    %43 = arith.mulf %25, %42 : vector<8x128xf32>
    %cst_26 = arith.constant -1.000000e+01 : f32
    %cst_27 = arith.constant 1.000000e+01 : f32
    %44 = vector.broadcast %cst_26 : f32 to vector<8x128xf32>
    %45 = arith.maximumf %44, %43 : vector<8x128xf32>
    %46 = vector.broadcast %cst_27 : f32 to vector<8x128xf32>
    %47 = arith.minimumf %46, %45 : vector<8x128xf32>
    %48 = vector.extract_strided_slice %27 {offsets = [1, 0], sizes = [1, 128], strides = [1, 1]} : vector<5x128xf32> to vector<1x128xf32>
    %49 = math.cos %47 : vector<8x128xf32>
    %50 = vector.broadcast %48 : vector<1x128xf32> to vector<8x128xf32>
    %51 = arith.mulf %50, %49 : vector<8x128xf32>
    %52 = arith.addf %40, %51 : vector<8x128xf32>
    %53 = vector.extract_strided_slice %26 {offsets = [2, 0], sizes = [1, 128], strides = [1, 1]} : vector<5x128xf32> to vector<1x128xf32>
    %54 = vector.broadcast %53 : vector<1x128xf32> to vector<8x128xf32>
    %55 = arith.mulf %25, %54 : vector<8x128xf32>
    %cst_28 = arith.constant -1.000000e+01 : f32
    %cst_29 = arith.constant 1.000000e+01 : f32
    %56 = vector.broadcast %cst_28 : f32 to vector<8x128xf32>
    %57 = arith.maximumf %56, %55 : vector<8x128xf32>
    %58 = vector.broadcast %cst_29 : f32 to vector<8x128xf32>
    %59 = arith.minimumf %58, %57 : vector<8x128xf32>
    %60 = vector.extract_strided_slice %27 {offsets = [2, 0], sizes = [1, 128], strides = [1, 1]} : vector<5x128xf32> to vector<1x128xf32>
    %61 = math.tanh %59 : vector<8x128xf32>
    %62 = vector.broadcast %60 : vector<1x128xf32> to vector<8x128xf32>
    %63 = arith.mulf %62, %61 : vector<8x128xf32>
    %64 = arith.addf %52, %63 : vector<8x128xf32>
    %65 = vector.extract_strided_slice %26 {offsets = [3, 0], sizes = [1, 128], strides = [1, 1]} : vector<5x128xf32> to vector<1x128xf32>
    %66 = vector.broadcast %65 : vector<1x128xf32> to vector<8x128xf32>
    %67 = arith.mulf %25, %66 : vector<8x128xf32>
    %cst_30 = arith.constant -1.000000e+01 : f32
    %cst_31 = arith.constant 1.000000e+01 : f32
    %68 = vector.broadcast %cst_30 : f32 to vector<8x128xf32>
    %69 = arith.maximumf %68, %67 : vector<8x128xf32>
    %70 = vector.broadcast %cst_31 : f32 to vector<8x128xf32>
    %71 = arith.minimumf %70, %69 : vector<8x128xf32>
    %72 = vector.extract_strided_slice %27 {offsets = [3, 0], sizes = [1, 128], strides = [1, 1]} : vector<5x128xf32> to vector<1x128xf32>
    %73 = arith.negf %71 : vector<8x128xf32>
    %74 = math.exp %73 : vector<8x128xf32>
    %cst_32 = arith.constant 1.000000e+00 : f32
    %75 = vector.broadcast %cst_32 : f32 to vector<8x128xf32>
    %76 = arith.addf %75, %74 : vector<8x128xf32>
    %77 = arith.divf %75, %76 : vector<8x128xf32>
    %78 = arith.mulf %71, %77 : vector<8x128xf32>
    %79 = vector.broadcast %72 : vector<1x128xf32> to vector<8x128xf32>
    %80 = arith.mulf %79, %78 : vector<8x128xf32>
    %81 = arith.addf %64, %80 : vector<8x128xf32>
    %82 = vector.extract_strided_slice %26 {offsets = [4, 0], sizes = [1, 128], strides = [1, 1]} : vector<5x128xf32> to vector<1x128xf32>
    %83 = vector.broadcast %82 : vector<1x128xf32> to vector<8x128xf32>
    %84 = arith.mulf %25, %83 : vector<8x128xf32>
    %cst_33 = arith.constant -1.000000e+01 : f32
    %cst_34 = arith.constant 1.000000e+01 : f32
    %85 = vector.broadcast %cst_33 : f32 to vector<8x128xf32>
    %86 = arith.maximumf %85, %84 : vector<8x128xf32>
    %87 = vector.broadcast %cst_34 : f32 to vector<8x128xf32>
    %88 = arith.minimumf %87, %86 : vector<8x128xf32>
    %89 = vector.extract_strided_slice %27 {offsets = [4, 0], sizes = [1, 128], strides = [1, 1]} : vector<5x128xf32> to vector<1x128xf32>
    %cst_35 = arith.constant 0.000000e+00 : f32
    %cst_36 = arith.constant 6.000000e+00 : f32
    %90 = vector.broadcast %cst_35 : f32 to vector<8x128xf32>
    %91 = arith.maximumf %90, %88 : vector<8x128xf32>
    %92 = vector.broadcast %cst_36 : f32 to vector<8x128xf32>
    %93 = arith.minimumf %92, %91 : vector<8x128xf32>
    %94 = vector.broadcast %89 : vector<1x128xf32> to vector<8x128xf32>
    %95 = arith.mulf %94, %93 : vector<8x128xf32>
    %96 = arith.addf %81, %95 : vector<8x128xf32>
    %c0_37 = arith.constant 0 : index
    %c0_38 = arith.constant 0 : index
    %97 = vector.load %arg10[%c0_37, %c0_38] : memref<128x128xf32, #tpu.memory_space<vmem>>, vector<128x128xf32>
    %cst_39 = arith.constant dense<0.000000e+00> : vector<8x128xf32>
    %98 = tpu.matmul %96, %97, %cst_39 {dimension_numbers = #tpu.dot_dimension_numbers<[1], [0], [0], [1], [0, 0, 1, 1], [], []>} : vector<8x128xf32>, vector<128x128xf32>, vector<8x128xf32> -> vector<8x128xf32>
    %c0_40 = arith.constant 0 : index
    %c0_41 = arith.constant 0 : index
    %99 = vector.load %arg11[%c0_40, %c0_41] : memref<1x128xf32, #tpu.memory_space<vmem>>, vector<1x128xf32>
    %100 = vector.broadcast %99 : vector<1x128xf32> to vector<8x128xf32>
    %101 = arith.addf %98, %100 : vector<8x128xf32>
    %cst_42 = arith.constant -1.000000e+02 : f32
    %cst_43 = arith.constant 1.000000e+02 : f32
    %102 = vector.broadcast %cst_42 : f32 to vector<8x128xf32>
    %103 = arith.maximumf %102, %101 : vector<8x128xf32>
    %104 = vector.broadcast %cst_43 : f32 to vector<8x128xf32>
    %105 = arith.minimumf %104, %103 : vector<8x128xf32>
    %c0_44 = arith.constant 0 : index
    %c0_45 = arith.constant 0 : index
    %106 = vector.load %arg12[%c0_44, %c0_45] : memref<128x128xf32, #tpu.memory_space<vmem>>, vector<128x128xf32>
    %cst_46 = arith.constant dense<0.000000e+00> : vector<8x128xf32>
    %107 = tpu.matmul %105, %106, %cst_46 {dimension_numbers = #tpu.dot_dimension_numbers<[1], [0], [0], [1], [0, 0, 1, 1], [], []>} : vector<8x128xf32>, vector<128x128xf32>, vector<8x128xf32> -> vector<8x128xf32>
    %cst_47 = arith.constant -1.000000e+02 : f32
    %cst_48 = arith.constant 1.000000e+02 : f32
    %108 = vector.broadcast %cst_47 : f32 to vector<8x128xf32>
    %109 = arith.maximumf %108, %107 : vector<8x128xf32>
    %110 = vector.broadcast %cst_48 : f32 to vector<8x128xf32>
    %111 = arith.minimumf %110, %109 : vector<8x128xf32>
    %c0_49 = arith.constant 0 : index
    %c0_50 = arith.constant 0 : index
    %112 = vector.load %arg13[%c0_49, %c0_50] : memref<8x128xf32, #tpu.memory_space<vmem>>, vector<8x128xf32>
    tpu.vector_store %arg13[%c0_49, %c0_50], %111 {strides = array<i32>} : memref<8x128xf32, #tpu.memory_space<vmem>>, vector<8x128xf32>,
    return
  }
  func.func @transform_0(%arg0: i32) -> (i32, i32) {
    %c0_i32 = arith.constant 0 : i32
    %c0_i32_0 = arith.constant 0 : i32
    return %arg0, %c0_i32 : i32, i32
  }
  func.func @transform_1(%arg0: i32) -> (i32, i32) {
    %c0_i32 = arith.constant 0 : i32
    %c0_i32_0 = arith.constant 0 : i32
    %c0_i32_1 = arith.constant 0 : i32
    return %c0_i32, %c0_i32_0 : i32, i32
  }
  func.func @transform_2(%arg0: i32) -> (i32, i32) {
    %c0_i32 = arith.constant 0 : i32
    %c0_i32_0 = arith.constant 0 : i32
    %c0_i32_1 = arith.constant 0 : i32
    return %c0_i32, %c0_i32_0 : i32, i32
  }
  func.func @transform_3(%arg0: i32) -> (i32, i32) {
    %c0_i32 = arith.constant 0 : i32
    %c0_i32_0 = arith.constant 0 : i32
    %c0_i32_1 = arith.constant 0 : i32
    return %c0_i32, %c0_i32_0 : i32, i32
  }
  func.func @transform_4(%arg0: i32) -> (i32, i32) {
    %c0_i32 = arith.constant 0 : i32
    %c0_i32_0 = arith.constant 0 : i32
    %c0_i32_1 = arith.constant 0 : i32
    return %c0_i32, %c0_i32_0 : i32, i32
  }
  func.func @transform_5(%arg0: i32) -> (i32, i32) {
    %c0_i32 = arith.constant 0 : i32
    %c0_i32_0 = arith.constant 0 : i32
    %c0_i32_1 = arith.constant 0 : i32
    return %c0_i32, %c0_i32_0 : i32, i32
  }
  func.func @transform_6(%arg0: i32) -> (i32, i32) {
    %c0_i32 = arith.constant 0 : i32
    %c0_i32_0 = arith.constant 0 : i32
    %c0_i32_1 = arith.constant 0 : i32
    return %c0_i32, %c0_i32_0 : i32, i32
  }
  func.func @transform_7(%arg0: i32) -> (i32, i32) {
    %c0_i32 = arith.constant 0 : i32
    %c0_i32_0 = arith.constant 0 : i32
    %c0_i32_1 = arith.constant 0 : i32
    return %c0_i32, %c0_i32_0 : i32, i32
  }
  func.func @transform_8(%arg0: i32) -> (i32, i32) {
    %c0_i32 = arith.constant 0 : i32
    %c0_i32_0 = arith.constant 0 : i32
    %c0_i32_1 = arith.constant 0 : i32
    return %c0_i32, %c0_i32_0 : i32, i32
  }
  func.func @transform_9(%arg0: i32) -> (i32, i32) {
    %c0_i32 = arith.constant 0 : i32
    %c0_i32_0 = arith.constant 0 : i32
    %c0_i32_1 = arith.constant 0 : i32
    return %c0_i32, %c0_i32_0 : i32, i32
  }
  func.func @transform_10(%arg0: i32) -> (i32, i32) {
    %c0_i32 = arith.constant 0 : i32
    %c0_i32_0 = arith.constant 0 : i32
    %c0_i32_1 = arith.constant 0 : i32
    return %c0_i32, %c0_i32_0 : i32, i32
  }
  func.func @transform_11(%arg0: i32) -> (i32, i32) {
    %c0_i32 = arith.constant 0 : i32
    %c0_i32_0 = arith.constant 0 : i32
    %c0_i32_1 = arith.constant 0 : i32
    return %c0_i32, %c0_i32_0 : i32, i32
  }
  func.func @transform_12(%arg0: i32) -> (i32, i32) {
    %c0_i32 = arith.constant 0 : i32
    %c0_i32_0 = arith.constant 0 : i32
    return %arg0, %c0_i32 : i32, i32
  }
}

</mosaic_0001>

<llo_original>
// kernel: tpu_custom_call.1
$region0: #{tpu_custom_call.1}
  #allocation0 [shape = 'u32[]', space=smem, size = 0x4, offset = 0x4, fixed_abs, tag = 'smem constant byte address 0x4 - core index']
  #allocation1 [shape = 'u32[144,128]{1,0:T(1,128)}', space=vmem, size = 0x12000, scoped, tag = 'internal scratch']
  %s0 = inlined_call_operand.hbm [shape: f32[8,32], index: 0, kind: input, shape index: {}]
  %s1 = inlined_call_operand.hbm [shape: f32[32,128], index: 1, kind: input, shape index: {}]
  %s2 = inlined_call_operand.vmem [shape: f32[1,128], index: 2, kind: input, shape index: {}]
  %s3 = inlined_call_operand.hbm [shape: f32[1,128], index: 3, kind: input, shape index: {}]
  %s4 = inlined_call_operand.hbm [shape: f32[1,128], index: 4, kind: input, shape index: {}]
  %s5 = inlined_call_operand.vmem [shape: f32[5,128], index: 5, kind: input, shape index: {}]
  %s6 = inlined_call_operand.hbm [shape: f32[5,128], index: 6, kind: input, shape index: {}]
  %s7 = inlined_call_operand.hbm [shape: f32[128,128], index: 7, kind: input, shape index: {}]
  %s8 = inlined_call_operand.hbm [shape: f32[128,128], index: 8, kind: input, shape index: {}]
  %s9 = inlined_call_operand.hbm [shape: f32[128,128], index: 9, kind: input, shape index: {}]
  %s10 = inlined_call_operand.vmem [shape: f32[1,128], index: 10, kind: input, shape index: {}]
  %s11 = inlined_call_operand.hbm [shape: f32[128,128], index: 11, kind: input, shape index: {}]
  %s12 = inlined_call_operand.hbm [shape: f32[8,128], index: 12, kind: output, shape index: {}]
  %s13 = sld [smem:[#allocation0]]
  $region94: #{tpu_custom_call.1} parent=0
    _
  %s15 = ssub.s32 1, %s13
  %s16 = scalar_select 0, %s15, %s13
  $region1: #{tpu_custom_call.1} parent=0
    #allocation2 [shape = 'u8[4096]{0}', space=vmem, size = 0x1000, scoped, tag = 'input window, operand 0, single buffered']
    #allocation3 [shape = 's32[1]{0}', space=sflag, size = 0x4, scoped, tag = 'scoped memory for tpu_custom_call.1']
    #allocation4 [shape = 's32[1]{0}', space=sflag, size = 0x4, scoped, tag = 'scoped memory for tpu_custom_call.1']
    #allocation5 [shape = 'u8[16384]{0}', space=vmem, size = 0x4000, scoped, tag = 'input window, operand 1, single buffered']
    #allocation6 [shape = 's32[1]{0}', space=sflag, size = 0x4, scoped, tag = 'scoped memory for tpu_custom_call.1']
    #allocation7 [shape = 'u8[512]{0}', space=vmem, size = 0x400, scoped, tag = 'input window, operand 3, single buffered']
    #allocation8 [shape = 'u8[512]{0}', space=vmem, size = 0x400, scoped, tag = 'input window, operand 4, single buffered']
    #allocation9 [shape = 's32[1]{0}', space=sflag, size = 0x4, scoped, tag = 'scoped memory for tpu_custom_call.1']
    #allocation10 [shape = 'u8[4096]{0}', space=vmem, size = 0x1000, scoped, tag = 'input window, operand 6, single buffered']
    #allocation11 [shape = 'u8[65536]{0}', space=vmem, size = 0x10000, scoped, tag = 'input window, operand 7, single buffered']
    #allocation12 [shape = 's32[1]{0}', space=sflag, size = 0x4, scoped, tag = 'scoped memory for tpu_custom_call.1']
    #allocation13 [shape = 'u8[65536]{0}', space=vmem, size = 0x10000, scoped, tag = 'input window, operand 8, single buffered']
    #allocation14 [shape = 'u8[65536]{0}', space=vmem, size = 0x10000, scoped, tag = 'input window, operand 9, single buffered']
    #allocation15 [shape = 's32[1]{0}', space=sflag, size = 0x4, scoped, tag = 'scoped memory for tpu_custom_call.1']
    #allocation16 [shape = 'u8[65536]{0}', space=vmem, size = 0x10000, scoped, tag = 'input window, operand 11, single buffered']
    #allocation17 [shape = 'u8[4096]{0}', space=vmem, size = 0x1000, scoped, tag = 'output window, operand 0, single buffered']
    %17 = vsyncpa [#allocation3], 0
    %18 = vsyncpa [#allocation6], 0
    %19 = vsyncpa [#allocation9], 0
    %20 = vsyncpa [#allocation12], 0
    %21 = vsyncpa [#allocation15], 0
    %22 = vsyncpa [#allocation4], 0
    // Predicated region
    $region2: #{tpu_custom_call.1} parent=1 // pred_check
      _
    $region3: #{tpu_custom_call.1} parent=1 // pred_check_branch
      %24 = sbr.rel (0) target = $region5
    $region4: #{tpu_custom_call.1} parent=1 // pred_region
      %s26 = ssub.s32 128, 128
      %27 = vsyncadd [#allocation3], %s26
      %s29 = sshll.u32 [#allocation2], 4
      %s30 = int_to_ptr.vmem [resolvable:$true] %s29
      %32 = dma.hbm_to_vmem [thread:$0]  %s0, 128, %s30, [#allocation3]
    $region5: #{tpu_custom_call.1} parent=1 // pred_fallthru
      _
    // Predicated region
    $region6: #{tpu_custom_call.1} parent=1 // pred_check
      _
    $region7: #{tpu_custom_call.1} parent=1 // pred_check_branch
      %34 = sbr.rel (0) target = $region9
    $region8: #{tpu_custom_call.1} parent=1 // pred_region
      %s36 = ssub.s32 512, 512
      %37 = vsyncadd [#allocation6], %s36
      %s38 = sshll.u32 [#allocation5], 4
      %s39 = int_to_ptr.vmem [resolvable:$true] %s38
      %44 = dma.hbm_to_vmem [thread:$0]  %s1, 512, %s39, [#allocation6], 128, 128, 8
    $region9: #{tpu_custom_call.1} parent=1 // pred_fallthru
      _
    // Predicated region
    $region10: #{tpu_custom_call.1} parent=1 // pred_check
      _
    $region11: #{tpu_custom_call.1} parent=1 // pred_check_branch
      %46 = sbr.rel (0) target = $region13
    $region12: #{tpu_custom_call.1} parent=1 // pred_region
      _
    $region13: #{tpu_custom_call.1} parent=1 // pred_fallthru
      _
    // Predicated region
    $region14: #{tpu_custom_call.1} parent=1 // pred_check
      _
    $region15: #{tpu_custom_call.1} parent=1 // pred_check_branch
      %48 = sbr.rel (0) target = $region17
    $region16: #{tpu_custom_call.1} parent=1 // pred_region
      %s50 = ssub.s32 16, 16
      %51 = vsyncadd [#allocation6], %s50
      %s53 = sshll.u32 [#allocation7], 4
      %s54 = int_to_ptr.vmem [resolvable:$true] %s53
      %56 = dma.hbm_to_vmem [thread:$0]  %s3, 16, %s54, [#allocation6]
    $region17: #{tpu_custom_call.1} parent=1 // pred_fallthru
      _
    // Predicated region
    $region18: #{tpu_custom_call.1} parent=1 // pred_check
      _
    $region19: #{tpu_custom_call.1} parent=1 // pred_check_branch
      %58 = sbr.rel (0) target = $region21
    $region20: #{tpu_custom_call.1} parent=1 // pred_region
      %s60 = ssub.s32 16, 16
      %61 = vsyncadd [#allocation9], %s60
      %s63 = sshll.u32 [#allocation8], 4
      %s64 = int_to_ptr.vmem [resolvable:$true] %s63
      %66 = dma.hbm_to_vmem [thread:$0]  %s4, 16, %s64, [#allocation9]
    $region21: #{tpu_custom_call.1} parent=1 // pred_fallthru
      _
    // Predicated region
    $region22: #{tpu_custom_call.1} parent=1 // pred_check
      _
    $region23: #{tpu_custom_call.1} parent=1 // pred_check_branch
      %68 = sbr.rel (0) target = $region25
    $region24: #{tpu_custom_call.1} parent=1 // pred_region
      _
    $region25: #{tpu_custom_call.1} parent=1 // pred_fallthru
      _
    // Predicated region
    $region26: #{tpu_custom_call.1} parent=1 // pred_check
      _
    $region27: #{tpu_custom_call.1} parent=1 // pred_check_branch
      %70 = sbr.rel (0) target = $region29
    $region28: #{tpu_custom_call.1} parent=1 // pred_region
      %s72 = ssub.s32 128, 128
      %73 = vsyncadd [#allocation9], %s72
      %s75 = sshll.u32 [#allocation10], 4
      %s76 = int_to_ptr.vmem [resolvable:$true] %s75
      %78 = dma.hbm_to_vmem [thread:$0]  %s6, 128, %s76, [#allocation9]
    $region29: #{tpu_custom_call.1} parent=1 // pred_fallthru
      _
    // Predicated region
    $region30: #{tpu_custom_call.1} parent=1 // pred_check
      _
    $region31: #{tpu_custom_call.1} parent=1 // pred_check_branch
      %80 = sbr.rel (0) target = $region33
    $region32: #{tpu_custom_call.1} parent=1 // pred_region
      %s82 = ssub.s32 2048, 2048
      %83 = vsyncadd [#allocation12], %s82
      %s84 = sshll.u32 [#allocation11], 4
      %s85 = int_to_ptr.vmem [resolvable:$true] %s84
      %90 = dma.hbm_to_vmem [thread:$0]  %s7, 2048, %s85, [#allocation12], 128, 128, 8
    $region33: #{tpu_custom_call.1} parent=1 // pred_fallthru
      _
    // Predicated region
    $region34: #{tpu_custom_call.1} parent=1 // pred_check
      _
    $region35: #{tpu_custom_call.1} parent=1 // pred_check_branch
      %92 = sbr.rel (0) target = $region37
    $region36: #{tpu_custom_call.1} parent=1 // pred_region
      %s94 = ssub.s32 2048, 2048
      %95 = vsyncadd [#allocation12], %s94
      %s96 = sshll.u32 [#allocation13], 4
      %s97 = int_to_ptr.vmem [resolvable:$true] %s96
      %102 = dma.hbm_to_vmem [thread:$0]  %s8, 2048, %s97, [#allocation12], 128, 128, 8
    $region37: #{tpu_custom_call.1} parent=1 // pred_fallthru
      _
    // Predicated region
    $region38: #{tpu_custom_call.1} parent=1 // pred_check
      _
    $region39: #{tpu_custom_call.1} parent=1 // pred_check_branch
      %104 = sbr.rel (0) target = $region41
    $region40: #{tpu_custom_call.1} parent=1 // pred_region
      %s106 = ssub.s32 2048, 2048
      %107 = vsyncadd [#allocation15], %s106
      %s108 = sshll.u32 [#allocation14], 4
      %s109 = int_to_ptr.vmem [resolvable:$true] %s108
      %114 = dma.hbm_to_vmem [thread:$0]  %s9, 2048, %s109, [#allocation15], 128, 128, 8
    $region41: #{tpu_custom_call.1} parent=1 // pred_fallthru
      _
    // Predicated region
    $region42: #{tpu_custom_call.1} parent=1 // pred_check
      _
    $region43: #{tpu_custom_call.1} parent=1 // pred_check_branch
      %116 = sbr.rel (0) target = $region45
    $region44: #{tpu_custom_call.1} parent=1 // pred_region
      _
    $region45: #{tpu_custom_call.1} parent=1 // pred_fallthru
      _
    // Predicated region
    $region46: #{tpu_custom_call.1} parent=1 // pred_check
      _
    $region47: #{tpu_custom_call.1} parent=1 // pred_check_branch
      %118 = sbr.rel (0) target = $region49
    $region48: #{tpu_custom_call.1} parent=1 // pred_region
      %s120 = ssub.s32 2048, 2048
      %121 = vsyncadd [#allocation15], %s120
      %s122 = sshll.u32 [#allocation16], 4
      %s123 = int_to_ptr.vmem [resolvable:$true] %s122
      %128 = dma.hbm_to_vmem [thread:$0]  %s11, 2048, %s123, [#allocation15], 128, 128, 8
    $region49: #{tpu_custom_call.1} parent=1 // pred_fallthru
      _
    // Predicated region
    $region50: #{tpu_custom_call.1} parent=1 // pred_check
      _
    $region51: #{tpu_custom_call.1} parent=1 // pred_check_branch
      %130 = sbr.rel (0) target = $region53
    $region52: #{tpu_custom_call.1} parent=1 // pred_region
      %131 = dma.done [#allocation3], 128
    $region53: #{tpu_custom_call.1} parent=1 // pred_fallthru
      _
    // Predicated region
    $region54: #{tpu_custom_call.1} parent=1 // pred_check
      _
    $region55: #{tpu_custom_call.1} parent=1 // pred_check_branch
      %133 = sbr.rel (0) target = $region57
    $region56: #{tpu_custom_call.1} parent=1 // pred_region
      %134 = dma.done [#allocation6], 512
    $region57: #{tpu_custom_call.1} parent=1 // pred_fallthru
      _
    // Predicated region
    $region58: #{tpu_custom_call.1} parent=1 // pred_check
      _
    $region59: #{tpu_custom_call.1} parent=1 // pred_check_branch
      %136 = sbr.rel (0) target = $region61
    $region60: #{tpu_custom_call.1} parent=1 // pred_region
      %137 = dma.done [#allocation6], 16
    $region61: #{tpu_custom_call.1} parent=1 // pred_fallthru
      _
    // Predicated region
    $region62: #{tpu_custom_call.1} parent=1 // pred_check
      _
    $region63: #{tpu_custom_call.1} parent=1 // pred_check_branch
      %139 = sbr.rel (0) target = $region65
    $region64: #{tpu_custom_call.1} parent=1 // pred_region
      %140 = dma.done [#allocation9], 16
    $region65: #{tpu_custom_call.1} parent=1 // pred_fallthru
      _
    // Predicated region
    $region66: #{tpu_custom_call.1} parent=1 // pred_check
      _
    $region67: #{tpu_custom_call.1} parent=1 // pred_check_branch
      %142 = sbr.rel (0) target = $region69
    $region68: #{tpu_custom_call.1} parent=1 // pred_region
      %143 = dma.done [#allocation9], 128
    $region69: #{tpu_custom_call.1} parent=1 // pred_fallthru
      _
    // Predicated region
    $region70: #{tpu_custom_call.1} parent=1 // pred_check
      _
    $region71: #{tpu_custom_call.1} parent=1 // pred_check_branch
      %145 = sbr.rel (0) target = $region73
    $region72: #{tpu_custom_call.1} parent=1 // pred_region
      %146 = dma.done [#allocation12], 2048
    $region73: #{tpu_custom_call.1} parent=1 // pred_fallthru
      _
    // Predicated region
    $region74: #{tpu_custom_call.1} parent=1 // pred_check
      _
    $region75: #{tpu_custom_call.1} parent=1 // pred_check_branch
      %148 = sbr.rel (0) target = $region77
    $region76: #{tpu_custom_call.1} parent=1 // pred_region
      %149 = dma.done [#allocation12], 2048
    $region77: #{tpu_custom_call.1} parent=1 // pred_fallthru
      _
    // Predicated region
    $region78: #{tpu_custom_call.1} parent=1 // pred_check
      _
    $region79: #{tpu_custom_call.1} parent=1 // pred_check_branch
      %151 = sbr.rel (0) target = $region81
    $region80: #{tpu_custom_call.1} parent=1 // pred_region
      %152 = dma.done [#allocation15], 2048
    $region81: #{tpu_custom_call.1} parent=1 // pred_fallthru
      _
    // Predicated region
    $region82: #{tpu_custom_call.1} parent=1 // pred_check
      _
    $region83: #{tpu_custom_call.1} parent=1 // pred_check_branch
      %154 = sbr.rel (0) target = $region85
    $region84: #{tpu_custom_call.1} parent=1 // pred_region
      %155 = dma.done [#allocation15], 2048
    $region85: #{tpu_custom_call.1} parent=1 // pred_fallthru
      _
    %v156 = vld [vmem:[#allocation2] sm:$0xff]
    %v157 = vld [vmem:[#allocation5] sm:$0xff]
    %v158 = vld [vmem:[#allocation5 + $0x8] sm:$0xff]
    %v159 = vld [vmem:[#allocation5 + $0x10] sm:$0xff]
    %v160 = vld [vmem:[#allocation5 + $0x18] sm:$0xff]
    %v161 = vld [vmem:[%s2] sm:$0x1]
    %v163 = vlaneseq
    %v164 = vshrl.u32 %v163, 7
    %v165 = vsub.s32 0, %v164
    %v166 = vrot.slane %v161, %v165
    %vm168 = vcmask 261120
    %v170 = vsel %vm168, %v156, 0
    %172 = vmatprep.subr.mxu0 0.0
    %173 = vmatpush1.msra.mxu0 0.0
    %174 = vmatprep.subr.mxu0 0.0
    %175 = vmatpush1.msra.mxu0 0.0
    %176 = vmatprep.subr.mxu0 0.0
    %177 = vmatpush1.msra.mxu0 0.0
    %178 = vmatprep.subr.mxu0 0.0
    %179 = vmatpush1.msra.mxu0 0.0
    %180 = vmatprep.subr.mxu0 0.0
    %181 = vmatpush1.msra.mxu0 0.0
    %182 = vmatprep.subr.mxu0 0.0
    %183 = vmatpush1.msra.mxu0 0.0
    %184 = vmatprep.subr.mxu0 0.0
    %185 = vmatpush1.msra.mxu0 0.0
    %186 = vmatprep.subr.mxu0 0.0
    %187 = vmatpush1.msra.mxu0 0.0
    %188 = vmatprep.subr.mxu0 0.0
    %189 = vmatpush1.msra.mxu0 0.0
    %190 = vmatprep.subr.mxu0 0.0
    %191 = vmatpush1.msra.mxu0 0.0
    %192 = vmatprep.subr.mxu0 0.0
    %193 = vmatpush1.msra.mxu0 0.0
    %194 = vmatprep.subr.mxu0 0.0
    %195 = vmatpush1.msra.mxu0 0.0
    %196 = vmatprep.subr.mxu0 0.0
    %197 = vmatpush1.msra.mxu0 %v160
    %198 = vmatprep.subr.mxu0 0.0
    %199 = vmatpush1.msra.mxu0 %v159
    %200 = vmatprep.subr.mxu0 0.0
    %201 = vmatpush1.msra.mxu0 %v158
    %202 = vmatprep.subr.mxu0 0.0
    %203 = vmatpush1.msra.mxu0 %v157
    %204 = vmatprep.subr.mxu0 0.0
    %205 = vmatpush2.msra.mxu0 0.0
    %206 = vmatprep.subr.mxu0 0.0
    %207 = vmatpush2.msra.mxu0 0.0
    %208 = vmatprep.subr.mxu0 0.0
    %209 = vmatpush2.msra.mxu0 0.0
    %210 = vmatprep.subr.mxu0 0.0
    %211 = vmatpush2.msra.mxu0 0.0
    %212 = vmatprep.subr.mxu0 0.0
    %213 = vmatpush2.msra.mxu0 0.0
    %214 = vmatprep.subr.mxu0 0.0
    %215 = vmatpush2.msra.mxu0 0.0
    %216 = vmatprep.subr.mxu0 0.0
    %217 = vmatpush2.msra.mxu0 0.0
    %218 = vmatprep.subr.mxu0 0.0
    %219 = vmatpush2.msra.mxu0 0.0
    %220 = vmatprep.subr.mxu0 0.0
    %221 = vmatpush2.msra.mxu0 0.0
    %222 = vmatprep.subr.mxu0 0.0
    %223 = vmatpush2.msra.mxu0 0.0
    %224 = vmatprep.subr.mxu0 0.0
    %225 = vmatpush2.msra.mxu0 0.0
    %226 = vmatprep.subr.mxu0 0.0
    %227 = vmatpush2.msra.mxu0 0.0
    %228 = vmatprep.subr.mxu0 0.0
    %229 = vmatpush2.msra.mxu0 0.0
    %230 = vmatprep.subr.mxu0 0.0
    %231 = vmatpush2.msra.mxu0 0.0
    %232 = vmatprep.subr.mxu0 0.0
    %233 = vmatpush2.msra.mxu0 0.0
    %234 = vmatprep.subr.mxu0 0.0
    %235 = vmatpush2.msra.mxu0 0.0
    %236 = vmatprep.mubr.f32.mxu0 0.0
    %237 = vmatmul.mubr.f32.gmra.mxu0 %v170
    %v238 = vpop.f32.mrf.mxu0
    %v239 = vadd.f32 %v166, %v238
    %v240 = vpop.f32.mrf.mxu0
    %241 = vdwg.mxu0
    %v242 = vld [vmem:[#allocation11] sm:$0xff]
    %v243 = vld [vmem:[#allocation11 + $0x8] sm:$0xff]
    %v244 = vld [vmem:[#allocation11 + $0x10] sm:$0xff]
    %v245 = vld [vmem:[#allocation11 + $0x18] sm:$0xff]
    %v246 = vld [vmem:[#allocation11 + $0x20] sm:$0xff]
    %v247 = vld [vmem:[#allocation11 + $0x28] sm:$0xff]
    %v248 = vld [vmem:[#allocation11 + $0x30] sm:$0xff]
    %v249 = vld [vmem:[#allocation11 + $0x38] sm:$0xff]
    %v250 = vld [vmem:[#allocation11 + $0x40] sm:$0xff]
    %v251 = vld [vmem:[#allocation11 + $0x48] sm:$0xff]
    %v252 = vld [vmem:[#allocation11 + $0x50] sm:$0xff]
    %v253 = vld [vmem:[#allocation11 + $0x58] sm:$0xff]
    %v254 = vld [vmem:[#allocation11 + $0x60] sm:$0xff]
    %v255 = vld [vmem:[#allocation11 + $0x68] sm:$0xff]
    %v256 = vld [vmem:[#allocation11 + $0x70] sm:$0xff]
    %v257 = vld [vmem:[#allocation11 + $0x78] sm:$0xff]
    %v258 = vld [vmem:[#allocation13] sm:$0xff]
    %v259 = vld [vmem:[#allocation13 + $0x8] sm:$0xff]
    %v260 = vld [vmem:[#allocation13 + $0x10] sm:$0xff]
    %v261 = vld [vmem:[#allocation13 + $0x18] sm:$0xff]
    %v262 = vld [vmem:[#allocation13 + $0x20] sm:$0xff]
    %v263 = vld [vmem:[#allocation13 + $0x28] sm:$0xff]
    %v264 = vld [vmem:[#allocation13 + $0x30] sm:$0xff]
    %v265 = vld [vmem:[#allocation13 + $0x38] sm:$0xff]
    %v266 = vld [vmem:[#allocation13 + $0x40] sm:$0xff]
    %v267 = vld [vmem:[#allocation13 + $0x48] sm:$0xff]
    %v268 = vld [vmem:[#allocation13 + $0x50] sm:$0xff]
    %v269 = vld [vmem:[#allocation13 + $0x58] sm:$0xff]
    %v270 = vld [vmem:[#allocation13 + $0x60] sm:$0xff]
    %v271 = vld [vmem:[#allocation13 + $0x68] sm:$0xff]
    %v272 = vld [vmem:[#allocation13 + $0x70] sm:$0xff]
    %v273 = vld [vmem:[#allocation13 + $0x78] sm:$0xff]
    %274 = vmatprep.subr.mxu0 0.0
    %275 = vmatpush1.msra.mxu0 %v257
    %276 = vmatprep.subr.mxu0 0.0
    %277 = vmatpush1.msra.mxu0 %v256
    %278 = vmatprep.subr.mxu0 0.0
    %279 = vmatpush1.msra.mxu0 %v255
    %280 = vmatprep.subr.mxu0 0.0
    %281 = vmatpush1.msra.mxu0 %v254
    %282 = vmatprep.subr.mxu0 0.0
    %283 = vmatpush1.msra.mxu0 %v253
    %284 = vmatprep.subr.mxu0 0.0
    %285 = vmatpush1.msra.mxu0 %v252
    %286 = vmatprep.subr.mxu0 0.0
    %287 = vmatpush1.msra.mxu0 %v251
    %288 = vmatprep.subr.mxu0 0.0
    %289 = vmatpush1.msra.mxu0 %v250
    %290 = vmatprep.subr.mxu0 0.0
    %291 = vmatpush1.msra.mxu0 %v249
    %292 = vmatprep.subr.mxu0 0.0
    %293 = vmatpush1.msra.mxu0 %v248
    %294 = vmatprep.subr.mxu0 0.0
    %295 = vmatpush1.msra.mxu0 %v247
    %296 = vmatprep.subr.mxu0 0.0
    %297 = vmatpush1.msra.mxu0 %v246
    %298 = vmatprep.subr.mxu0 0.0
    %299 = vmatpush1.msra.mxu0 %v245
    %300 = vmatprep.subr.mxu0 0.0
    %301 = vmatpush1.msra.mxu0 %v244
    %302 = vmatprep.subr.mxu0 0.0
    %303 = vmatpush1.msra.mxu0 %v243
    %304 = vmatprep.subr.mxu0 0.0
    %305 = vmatpush1.msra.mxu0 %v242
    %306 = vmatprep.subr.mxu0 0.0
    %307 = vmatpush2.msra.mxu0 0.0
    %308 = vmatprep.subr.mxu0 0.0
    %309 = vmatpush2.msra.mxu0 0.0
    %310 = vmatprep.subr.mxu0 0.0
    %311 = vmatpush2.msra.mxu0 0.0
    %312 = vmatprep.subr.mxu0 0.0
    %313 = vmatpush2.msra.mxu0 0.0
    %314 = vmatprep.subr.mxu0 0.0
    %315 = vmatpush2.msra.mxu0 0.0
    %316 = vmatprep.subr.mxu0 0.0
    %317 = vmatpush2.msra.mxu0 0.0
    %318 = vmatprep.subr.mxu0 0.0
    %319 = vmatpush2.msra.mxu0 0.0
    %320 = vmatprep.subr.mxu0 0.0
    %321 = vmatpush2.msra.mxu0 0.0
    %322 = vmatprep.subr.mxu0 0.0
    %323 = vmatpush2.msra.mxu0 0.0
    %324 = vmatprep.subr.mxu0 0.0
    %325 = vmatpush2.msra.mxu0 0.0
    %326 = vmatprep.subr.mxu0 0.0
    %327 = vmatpush2.msra.mxu0 0.0
    %328 = vmatprep.subr.mxu0 0.0
    %329 = vmatpush2.msra.mxu0 0.0
    %330 = vmatprep.subr.mxu0 0.0
    %331 = vmatpush2.msra.mxu0 0.0
    %332 = vmatprep.subr.mxu0 0.0
    %333 = vmatpush2.msra.mxu0 0.0
    %334 = vmatprep.subr.mxu0 0.0
    %335 = vmatpush2.msra.mxu0 0.0
    %336 = vmatprep.subr.mxu0 0.0
    %337 = vmatpush2.msra.mxu0 0.0
    %338 = vmatprep.mubr.f32.mxu0 0.0
    %339 = vmatmul.mubr.f32.gmra.mxu0 %v239
    %v340 = vpop.f32.mrf.mxu0
    %v341 = vadd.f32 0.0, %v340
    %v342 = vpop.f32.mrf.mxu0
    %343 = vdwg.mxu0
    %344 = vmatprep.subr.mxu0 0.0
    %345 = vmatpush1.msra.mxu0 %v273
    %346 = vmatprep.subr.mxu0 0.0
    %347 = vmatpush1.msra.mxu0 %v272
    %348 = vmatprep.subr.mxu0 0.0
    %349 = vmatpush1.msra.mxu0 %v271
    %350 = vmatprep.subr.mxu0 0.0
    %351 = vmatpush1.msra.mxu0 %v270
    %352 = vmatprep.subr.mxu0 0.0
    %353 = vmatpush1.msra.mxu0 %v269
    %354 = vmatprep.subr.mxu0 0.0
    %355 = vmatpush1.msra.mxu0 %v268
    %356 = vmatprep.subr.mxu0 0.0
    %357 = vmatpush1.msra.mxu0 %v267
    %358 = vmatprep.subr.mxu0 0.0
    %359 = vmatpush1.msra.mxu0 %v266
    %360 = vmatprep.subr.mxu0 0.0
    %361 = vmatpush1.msra.mxu0 %v265
    %362 = vmatprep.subr.mxu0 0.0
    %363 = vmatpush1.msra.mxu0 %v264
    %364 = vmatprep.subr.mxu0 0.0
    %365 = vmatpush1.msra.mxu0 %v263
    %366 = vmatprep.subr.mxu0 0.0
    %367 = vmatpush1.msra.mxu0 %v262
    %368 = vmatprep.subr.mxu0 0.0
    %369 = vmatpush1.msra.mxu0 %v261
    %370 = vmatprep.subr.mxu0 0.0
    %371 = vmatpush1.msra.mxu0 %v260
    %372 = vmatprep.subr.mxu0 0.0
    %373 = vmatpush1.msra.mxu0 %v259
    %374 = vmatprep.subr.mxu0 0.0
    %375 = vmatpush1.msra.mxu0 %v258
    %376 = vmatprep.subr.mxu0 0.0
    %377 = vmatpush2.msra.mxu0 0.0
    %378 = vmatprep.subr.mxu0 0.0
    %379 = vmatpush2.msra.mxu0 0.0
    %380 = vmatprep.subr.mxu0 0.0
    %381 = vmatpush2.msra.mxu0 0.0
    %382 = vmatprep.subr.mxu0 0.0
    %383 = vmatpush2.msra.mxu0 0.0
    %384 = vmatprep.subr.mxu0 0.0
    %385 = vmatpush2.msra.mxu0 0.0
    %386 = vmatprep.subr.mxu0 0.0
    %387 = vmatpush2.msra.mxu0 0.0
    %388 = vmatprep.subr.mxu0 0.0
    %389 = vmatpush2.msra.mxu0 0.0
    %390 = vmatprep.subr.mxu0 0.0
    %391 = vmatpush2.msra.mxu0 0.0
    %392 = vmatprep.subr.mxu0 0.0
    %393 = vmatpush2.msra.mxu0 0.0
    %394 = vmatprep.subr.mxu0 0.0
    %395 = vmatpush2.msra.mxu0 0.0
    %396 = vmatprep.subr.mxu0 0.0
    %397 = vmatpush2.msra.mxu0 0.0
    %398 = vmatprep.subr.mxu0 0.0
    %399 = vmatpush2.msra.mxu0 0.0
    %400 = vmatprep.subr.mxu0 0.0
    %401 = vmatpush2.msra.mxu0 0.0
    %402 = vmatprep.subr.mxu0 0.0
    %403 = vmatpush2.msra.mxu0 0.0
    %404 = vmatprep.subr.mxu0 0.0
    %405 = vmatpush2.msra.mxu0 0.0
    %406 = vmatprep.subr.mxu0 0.0
    %407 = vmatpush2.msra.mxu0 0.0
    %408 = vmatprep.mubr.f32.mxu0 0.0
    %409 = vmatmul.mubr.f32.gmra.mxu0 %v341
    %v410 = vpop.f32.mrf.mxu0
    %v411 = vadd.f32 0.0, %v410
    %v412 = vpop.f32.mrf.mxu0
    %413 = vdwg.mxu0
    %v414 = vsub.f32 %v239, %v411
    %v415 = vmul.f32 %v414, %v414
    %416 = vmatprep.subr.mxu0 0.0
    %417 = vmatpush1.msra.mxu0 %v257
    %418 = vmatprep.subr.mxu0 0.0
    %419 = vmatpush1.msra.mxu0 %v256
    %420 = vmatprep.subr.mxu0 0.0
    %421 = vmatpush1.msra.mxu0 %v255
    %422 = vmatprep.subr.mxu0 0.0
    %423 = vmatpush1.msra.mxu0 %v254
    %424 = vmatprep.subr.mxu0 0.0
    %425 = vmatpush1.msra.mxu0 %v253
    %426 = vmatprep.subr.mxu0 0.0
    %427 = vmatpush1.msra.mxu0 %v252
    %428 = vmatprep.subr.mxu0 0.0
    %429 = vmatpush1.msra.mxu0 %v251
    %430 = vmatprep.subr.mxu0 0.0
    %431 = vmatpush1.msra.mxu0 %v250
    %432 = vmatprep.subr.mxu0 0.0
    %433 = vmatpush1.msra.mxu0 %v249
    %434 = vmatprep.subr.mxu0 0.0
    %435 = vmatpush1.msra.mxu0 %v248
    %436 = vmatprep.subr.mxu0 0.0
    %437 = vmatpush1.msra.mxu0 %v247
    %438 = vmatprep.subr.mxu0 0.0
    %439 = vmatpush1.msra.mxu0 %v246
    %440 = vmatprep.subr.mxu0 0.0
    %441 = vmatpush1.msra.mxu0 %v245
    %442 = vmatprep.subr.mxu0 0.0
    %443 = vmatpush1.msra.mxu0 %v244
    %444 = vmatprep.subr.mxu0 0.0
    %445 = vmatpush1.msra.mxu0 %v243
    %446 = vmatprep.subr.mxu0 0.0
    %447 = vmatpush1.msra.mxu0 %v242
    %448 = vmatprep.subr.mxu0 0.0
    %449 = vmatpush2.msra.mxu0 0.0
    %450 = vmatprep.subr.mxu0 0.0
    %451 = vmatpush2.msra.mxu0 0.0
    %452 = vmatprep.subr.mxu0 0.0
    %453 = vmatpush2.msra.mxu0 0.0
    %454 = vmatprep.subr.mxu0 0.0
    %455 = vmatpush2.msra.mxu0 0.0
    %456 = vmatprep.subr.mxu0 0.0
    %457 = vmatpush2.msra.mxu0 0.0
    %458 = vmatprep.subr.mxu0 0.0
    %459 = vmatpush2.msra.mxu0 0.0
    %460 = vmatprep.subr.mxu0 0.0
    %461 = vmatpush2.msra.mxu0 0.0
    %462 = vmatprep.subr.mxu0 0.0
    %463 = vmatpush2.msra.mxu0 0.0
    %464 = vmatprep.subr.mxu0 0.0
    %465 = vmatpush2.msra.mxu0 0.0
    %466 = vmatprep.subr.mxu0 0.0
    %467 = vmatpush2.msra.mxu0 0.0
    %468 = vmatprep.subr.mxu0 0.0
    %469 = vmatpush2.msra.mxu0 0.0
    %470 = vmatprep.subr.mxu0 0.0
    %471 = vmatpush2.msra.mxu0 0.0
    %472 = vmatprep.subr.mxu0 0.0
    %473 = vmatpush2.msra.mxu0 0.0
    %474 = vmatprep.subr.mxu0 0.0
    %475 = vmatpush2.msra.mxu0 0.0
    %476 = vmatprep.subr.mxu0 0.0
    %477 = vmatpush2.msra.mxu0 0.0
    %478 = vmatprep.subr.mxu0 0.0
    %479 = vmatpush2.msra.mxu0 0.0
    %480 = vmatprep.mubr.f32.mxu0 0.0
    %481 = vmatmul.mubr.f32.gmra.mxu0 %v415
    %v482 = vpop.f32.mrf.mxu0
    %v483 = vadd.f32 1e-05, %v482
    %v484 = vpop.f32.mrf.mxu0
    %485 = vdwg.mxu0
    %v486 = vrsqrt.pop %v483
    %487 = vmatprep.subr.mxu0 0.0
    %488 = vmatpush1.msra.mxu0 %v273
    %489 = vmatprep.subr.mxu0 0.0
    %490 = vmatpush1.msra.mxu0 %v272
    %491 = vmatprep.subr.mxu0 0.0
    %492 = vmatpush1.msra.mxu0 %v271
    %493 = vmatprep.subr.mxu0 0.0
    %494 = vmatpush1.msra.mxu0 %v270
    %495 = vmatprep.subr.mxu0 0.0
    %496 = vmatpush1.msra.mxu0 %v269
    %497 = vmatprep.subr.mxu0 0.0
    %498 = vmatpush1.msra.mxu0 %v268
    %499 = vmatprep.subr.mxu0 0.0
    %500 = vmatpush1.msra.mxu0 %v267
    %501 = vmatprep.subr.mxu0 0.0
    %502 = vmatpush1.msra.mxu0 %v266
    %503 = vmatprep.subr.mxu0 0.0
    %504 = vmatpush1.msra.mxu0 %v265
    %505 = vmatprep.subr.mxu0 0.0
    %506 = vmatpush1.msra.mxu0 %v264
    %507 = vmatprep.subr.mxu0 0.0
    %508 = vmatpush1.msra.mxu0 %v263
    %509 = vmatprep.subr.mxu0 0.0
    %510 = vmatpush1.msra.mxu0 %v262
    %511 = vmatprep.subr.mxu0 0.0
    %512 = vmatpush1.msra.mxu0 %v261
    %513 = vmatprep.subr.mxu0 0.0
    %514 = vmatpush1.msra.mxu0 %v260
    %515 = vmatprep.subr.mxu0 0.0
    %516 = vmatpush1.msra.mxu0 %v259
    %517 = vmatprep.subr.mxu0 0.0
    %518 = vmatpush1.msra.mxu0 %v258
    %519 = vmatprep.subr.mxu0 0.0
    %520 = vmatpush2.msra.mxu0 0.0
    %521 = vmatprep.subr.mxu0 0.0
    %522 = vmatpush2.msra.mxu0 0.0
    %523 = vmatprep.subr.mxu0 0.0
    %524 = vmatpush2.msra.mxu0 0.0
    %525 = vmatprep.subr.mxu0 0.0
    %526 = vmatpush2.msra.mxu0 0.0
    %527 = vmatprep.subr.mxu0 0.0
    %528 = vmatpush2.msra.mxu0 0.0
    %529 = vmatprep.subr.mxu0 0.0
    %530 = vmatpush2.msra.mxu0 0.0
    %531 = vmatprep.subr.mxu0 0.0
    %532 = vmatpush2.msra.mxu0 0.0
    %533 = vmatprep.subr.mxu0 0.0
    %534 = vmatpush2.msra.mxu0 0.0
    %535 = vmatprep.subr.mxu0 0.0
    %536 = vmatpush2.msra.mxu0 0.0
    %537 = vmatprep.subr.mxu0 0.0
    %538 = vmatpush2.msra.mxu0 0.0
    %539 = vmatprep.subr.mxu0 0.0
    %540 = vmatpush2.msra.mxu0 0.0
    %541 = vmatprep.subr.mxu0 0.0
    %542 = vmatpush2.msra.mxu0 0.0
    %543 = vmatprep.subr.mxu0 0.0
    %544 = vmatpush2.msra.mxu0 0.0
    %545 = vmatprep.subr.mxu0 0.0
    %546 = vmatpush2.msra.mxu0 0.0
    %547 = vmatprep.subr.mxu0 0.0
    %548 = vmatpush2.msra.mxu0 0.0
    %549 = vmatprep.subr.mxu0 0.0
    %550 = vmatpush2.msra.mxu0 0.0
    %551 = vmatprep.mubr.f32.mxu0 0.0
    %552 = vmatmul.mubr.f32.gmra.mxu0 %v486
    %v553 = vpop.f32.mrf.mxu0
    %v554 = vadd.f32 0.0, %v553
    %v555 = vpop.f32.mrf.mxu0
    %556 = vdwg.mxu0
    %v557 = vmul.f32 %v414, %v554
    %v558 = vld [vmem:[#allocation7] sm:$0x1]
    %v560 = vlaneseq
    %v561 = vshrl.u32 %v560, 7
    %v562 = vsub.s32 0, %v561
    %v563 = vrot.slane %v558, %v562
    %v565 = vmul.f32 %v557, %v563
    %v566 = vld [vmem:[#allocation8] sm:$0x1]
    %v568 = vlaneseq
    %v569 = vshrl.u32 %v568, 7
    %v570 = vsub.s32 0, %v569
    %v571 = vrot.slane %v566, %v570
    %v573 = vadd.f32 %v565, %v571
    %v574 = vmax.f32 %v573, 0.0
    %v575 = vld [vmem:[#allocation10] sm:$0x1f]
    %v576 = vld [vmem:[%s5] sm:$0x1f]
    %v577 = vlaneseq
    %v578 = vshrl.u32 %v577, 7
    %v579 = vsub.s32 0, %v578
    %v580 = vrot.slane %v575, %v579
    %v581 = vmul.f32 %v574, %v580
    %v582 = vmax.f32 %v581, -10.0
    %v583 = vmin.f32 %v582, 10.0
    %v584 = vand.u32 2147483647, %v583
    %vm585 = vcmp.le.f32.partialorder %v584, 0.7853982
    %vm586 = vcmp.lt.s32.totalorder %v583, 0
    %v587 = vand.u32 %v583, 2139095040
    %v588 = vshrl.u32 %v587, 23
    %v589 = vsub.s32 %v588, 127
    %v590 = vand.u32 2147483647, %v583
    %v591 = vand.u32 %v590, 8388607
    %v592 = vor.u32 %v591, 8388608
    %v593 = vsub.s32 0, %v592
    %v594 = vadd.s32 %v589, 1
    %vm595 = vcmp.gt.s32.totalorder %v594, 0
    %v596 = vsel %vm595, %v594, 0
    %v597 = vshrl.u32 %v596, 5
    %v598 = vand.u32 %v596, 31
    %v599 = vsub.s32 32, %v598
    %v600 = vshrl.u32 683565275, %v599
    %v601 = vshll.u32 683565275, %v598
    %v602 = vshrl.u32 2475754826, %v599
    %v603 = vor.u32 %v601, %v602
    %v604 = vshll.u32 2475754826, %v598
    %v605 = vshrl.u32 2131351028, %v599
    %v606 = vor.u32 %v604, %v605
    %v607 = vshll.u32 2131351028, %v598
    %v608 = vshrl.u32 2102212464, %v599
    %v609 = vor.u32 %v607, %v608
    %v610 = vshll.u32 2102212464, %v598
    %v611 = vshrl.u32 920167782, %v599
    %v612 = vor.u32 %v610, %v611
    %v613 = vshll.u32 920167782, %v598
    %v614 = vshrl.u32 1326507024, %v599
    %v615 = vor.u32 %v613, %v614
    %vm616 = vcmp.lt.s32.totalorder %v597, 1
    %vm617 = vcmp.lt.s32.totalorder %v597, 2
    %vm618 = vcmp.lt.s32.totalorder %v597, 3
    %vm619 = vcmp.lt.s32.totalorder %v597, 4
    %v620 = vsel %vm616, %v600, %v603
    %v621 = vsel %vm619, %v609, 2102212464
    %v622 = vsel %vm618, %v606, %v621
    %v623 = vsel %vm617, %v620, %v622
    %v624 = vsel %vm616, %v603, %v606
    %v625 = vsel %vm619, %v612, 920167782
    %v626 = vsel %vm618, %v609, %v625
    %v627 = vsel %vm617, %v624, %v626
    %v628 = vsel %vm616, %v606, %v609
    %v629 = vsel %vm619, %v615, 1326507024
    %v630 = vsel %vm618, %v612, %v629
    %v631 = vsel %vm617, %v628, %v630
    %v632 = vshll.u32 %v592, 8
    %v633 = vmul.u32.u64.compose %v632, %v631
    %v634 = vextract.low.u32 %v633
    %v635 = vextract.high.u32 %v633
    %v636 = vmul.u32.u64.compose %v632, %v627
    %v637 = vextract.low.u32 %v636
    %v638 = vextract.high.u32 %v636
    %v639 = vmul.u32 %v632, %v623
    %v640 = vadd.s32 %v635, %v637
    %vm641 = vc.u32 %v635, %v637
    %v642 = vadd.s32 %v638, 1
    %v643 = vsel %vm641, %v642, %v638
    %v644 = vadd.s32 %v639, %v643
    %v645 = vadd.s32 %v644, 536870912
    %v646 = vshrl.u32 %v645, 30
    %v647 = vshll.u32 %v646, 30
    %v648 = vsub.s32 %v644, %v647
    %vm649 = vcmp.lt.s32.totalorder %v648, 0
    %v650 = vsub.s32 0, %v648
    %v651 = vsel %vm649, %v650, %v648
    %v652 = vclz %v651
    %v653 = vsub.s32 %v652, 2
    %vm654 = vcmp.gt.s32.totalorder 0, %v653
    %v655 = vsel %vm654, 0, %v653
    %v656 = vsub.s32 32, %v655
    %v657 = vshll.u32 %v648, %v655
    %v658 = vshrl.u32 %v640, %v656
    %v659 = vor.u32 %v657, %v658
    %v660 = vsub.s32 4294967266, %v655
    %v661 = vadd.s32 %v660, 127
    %v662 = vshll.u32 %v661, 23
    %v663 = vor.u32 4788187, %v662
    %v664 = vand.u32 2147483647, %v663
    %v666 = vcvt.s32.f32 %v659
    %v667 = vmul.f32 %v666, %v664
    %v668 = vxor.u32 %v667, 2147483648
    %v669 = vsel %vm586, %v668, %v667
    %v670 = vsub.s32 4, %v646
    %v671 = vsel %vm586, %v670, %v646
    %v672 = vsel %vm585, %v583, %v669
    %v673 = vsel %vm585, 0, %v671
    %v674 = vcosq.f32.pop %v672
    %v675 = vsinq.f32.pop %v672
    %vm676 = vweird.f32 %v583
    %v677 = vadd.s32 %v673, 3
    %v678 = vand.u32 %v677, 3
    %vm679 = vcmp.lt.s32.totalorder %v678, 2
    %vm680 = vcmp.eq.s32.totalorder %v678, 0
    %v681 = vxor.u32 %v675, 2147483648
    %v682 = vsel %vm680, %v674, %v681
    %vm683 = vcmp.eq.s32.totalorder %v678, 2
    %v684 = vxor.u32 %v674, 2147483648
    %v685 = vsel %vm683, %v684, %v675
    %v686 = vsel %vm679, %v682, %v685
    %v687 = vsel %vm676, nan, %v686
    %v688 = vlaneseq
    %v689 = vshrl.u32 %v688, 7
    %v690 = vsub.s32 0, %v689
    %v691 = vrot.slane %v576, %v690
    %v692 = vmul.f32 %v691, %v687
    %v693 = vadd.f32 %v692, 0.0
    %v694 = vlaneseq
    %v695 = vshrl.u32 %v694, 7
    %v696 = vsub.s32 1, %v695
    %v697 = vrot.slane %v575, %v696
    %v698 = vmul.f32 %v574, %v697
    %v699 = vmax.f32 %v698, -10.0
    %v700 = vmin.f32 %v699, 10.0
    %v701 = vand.u32 2147483647, %v700
    %vm702 = vcmp.le.f32.partialorder %v701, 0.7853982
    %vm703 = vcmp.lt.s32.totalorder %v700, 0
    %v704 = vand.u32 %v700, 2139095040
    %v705 = vshrl.u32 %v704, 23
    %v706 = vsub.s32 %v705, 127
    %v707 = vand.u32 2147483647, %v700
    %v708 = vand.u32 %v707, 8388607
    %v709 = vor.u32 %v708, 8388608
    %v710 = vsub.s32 0, %v709
    %v711 = vadd.s32 %v706, 1
    %vm712 = vcmp.gt.s32.totalorder %v711, 0
    %v713 = vsel %vm712, %v711, 0
    %v714 = vshrl.u32 %v713, 5
    %v715 = vand.u32 %v713, 31
    %v716 = vsub.s32 32, %v715
    %v717 = vshrl.u32 683565275, %v716
    %v718 = vshll.u32 683565275, %v715
    %v719 = vshrl.u32 2475754826, %v716
    %v720 = vor.u32 %v718, %v719
    %v721 = vshll.u32 2475754826, %v715
    %v722 = vshrl.u32 2131351028, %v716
    %v723 = vor.u32 %v721, %v722
    %v724 = vshll.u32 2131351028, %v715
    %v725 = vshrl.u32 2102212464, %v716
    %v726 = vor.u32 %v724, %v725
    %v727 = vshll.u32 2102212464, %v715
    %v728 = vshrl.u32 920167782, %v716
    %v729 = vor.u32 %v727, %v728
    %v730 = vshll.u32 920167782, %v715
    %v731 = vshrl.u32 1326507024, %v716
    %v732 = vor.u32 %v730, %v731
    %vm733 = vcmp.lt.s32.totalorder %v714, 1
    %vm734 = vcmp.lt.s32.totalorder %v714, 2
    %vm735 = vcmp.lt.s32.totalorder %v714, 3
    %vm736 = vcmp.lt.s32.totalorder %v714, 4
    %v737 = vsel %vm733, %v717, %v720
    %v738 = vsel %vm736, %v726, 2102212464
    %v739 = vsel %vm735, %v723, %v738
    %v740 = vsel %vm734, %v737, %v739
    %v741 = vsel %vm733, %v720, %v723
    %v742 = vsel %vm736, %v729, 920167782
    %v743 = vsel %vm735, %v726, %v742
    %v744 = vsel %vm734, %v741, %v743
    %v745 = vsel %vm733, %v723, %v726
    %v746 = vsel %vm736, %v732, 1326507024
    %v747 = vsel %vm735, %v729, %v746
    %v748 = vsel %vm734, %v745, %v747
    %v749 = vshll.u32 %v709, 8
    %v750 = vmul.u32.u64.compose %v749, %v748
    %v751 = vextract.low.u32 %v750
    %v752 = vextract.high.u32 %v750
    %v753 = vmul.u32.u64.compose %v749, %v744
    %v754 = vextract.low.u32 %v753
    %v755 = vextract.high.u32 %v753
    %v756 = vmul.u32 %v749, %v740
    %v757 = vadd.s32 %v752, %v754
    %vm758 = vc.u32 %v752, %v754
    %v759 = vadd.s32 %v755, 1
    %v760 = vsel %vm758, %v759, %v755
    %v761 = vadd.s32 %v756, %v760
    %v762 = vadd.s32 %v761, 536870912
    %v763 = vshrl.u32 %v762, 30
    %v764 = vshll.u32 %v763, 30
    %v765 = vsub.s32 %v761, %v764
    %vm766 = vcmp.lt.s32.totalorder %v765, 0
    %v767 = vsub.s32 0, %v765
    %v768 = vsel %vm766, %v767, %v765
    %v769 = vclz %v768
    %v770 = vsub.s32 %v769, 2
    %vm771 = vcmp.gt.s32.totalorder 0, %v770
    %v772 = vsel %vm771, 0, %v770
    %v773 = vsub.s32 32, %v772
    %v774 = vshll.u32 %v765, %v772
    %v775 = vshrl.u32 %v757, %v773
    %v776 = vor.u32 %v774, %v775
    %v777 = vsub.s32 4294967266, %v772
    %v778 = vadd.s32 %v777, 127
    %v779 = vshll.u32 %v778, 23
    %v780 = vor.u32 4788187, %v779
    %v781 = vand.u32 2147483647, %v780
    %v783 = vcvt.s32.f32 %v776
    %v784 = vmul.f32 %v783, %v781
    %v785 = vxor.u32 %v784, 2147483648
    %v786 = vsel %vm703, %v785, %v784
    %v787 = vsub.s32 4, %v763
    %v788 = vsel %vm703, %v787, %v763
    %v789 = vsel %vm702, %v700, %v786
    %v790 = vsel %vm702, 0, %v788
    %v791 = vcosq.f32.pop %v789
    %v792 = vsinq.f32.pop %v789
    %vm793 = vweird.f32 %v700
    %v794 = vand.u32 %v790, 3
    %vm795 = vcmp.lt.s32.totalorder %v794, 2
    %vm796 = vcmp.eq.s32.totalorder %v794, 0
    %v797 = vxor.u32 %v792, 2147483648
    %v798 = vsel %vm796, %v791, %v797
    %vm799 = vcmp.eq.s32.totalorder %v794, 2
    %v800 = vxor.u32 %v791, 2147483648
    %v801 = vsel %vm799, %v800, %v792
    %v802 = vsel %vm795, %v798, %v801
    %v803 = vsel %vm793, nan, %v802
    %v804 = vlaneseq
    %v805 = vshrl.u32 %v804, 7
    %v806 = vsub.s32 1, %v805
    %v807 = vrot.slane %v576, %v806
    %v808 = vmul.f32 %v807, %v803
    %v809 = vadd.f32 %v693, %v808
    %v810 = vlaneseq
    %v811 = vshrl.u32 %v810, 7
    %v812 = vsub.s32 2, %v811
    %v813 = vrot.slane %v575, %v812
    %v814 = vmul.f32 %v574, %v813
    %v815 = vmax.f32 %v814, -10.0
    %v816 = vmin.f32 %v815, 10.0
    %v817 = vtanh.pop %v816
    %v818 = vlaneseq
    %v819 = vshrl.u32 %v818, 7
    %v820 = vsub.s32 2, %v819
    %v821 = vrot.slane %v576, %v820
    %v822 = vmul.f32 %v821, %v817
    %v823 = vadd.f32 %v809, %v822
    %v824 = vlaneseq
    %v825 = vshrl.u32 %v824, 7
    %v826 = vsub.s32 3, %v825
    %v827 = vrot.slane %v575, %v826
    %v828 = vmul.f32 %v574, %v827
    %v829 = vmax.f32 %v828, -10.0
    %v830 = vmin.f32 %v829, 10.0
    %v831 = vxor.u32 %v830, 2147483648
    %v832 = vmul.f32 %v831, 1.442695
    %v833 = vpow.pop %v832
    %v834 = vadd.f32 %v833, 1.0
    %v835 = vrcp.pop %v834
    %v836 = vmul.f32 1.0, %v835
    %v837 = vmul.f32 %v830, %v836
    %v838 = vlaneseq
    %v839 = vshrl.u32 %v838, 7
    %v840 = vsub.s32 3, %v839
    %v841 = vrot.slane %v576, %v840
    %v842 = vmul.f32 %v841, %v837
    %v843 = vadd.f32 %v823, %v842
    %v844 = vlaneseq
    %v845 = vshrl.u32 %v844, 7
    %v846 = vsub.s32 4, %v845
    %v847 = vrot.slane %v575, %v846
    %v848 = vmul.f32 %v574, %v847
    %v849 = vmax.f32 %v848, -10.0
    %v850 = vmin.f32 %v849, 10.0
    %v851 = vmax.f32 %v850, 0.0
    %v852 = vmin.f32 %v851, 6.0
    %v853 = vlaneseq
    %v854 = vshrl.u32 %v853, 7
    %v855 = vsub.s32 4, %v854
    %v856 = vrot.slane %v576, %v855
    %v857 = vmul.f32 %v856, %v852
    %v858 = vadd.f32 %v843, %v857
    %v859 = vld [vmem:[#allocation14] sm:$0xff]
    %v860 = vld [vmem:[#allocation14 + $0x8] sm:$0xff]
    %v861 = vld [vmem:[#allocation14 + $0x10] sm:$0xff]
    %v862 = vld [vmem:[#allocation14 + $0x18] sm:$0xff]
    %v863 = vld [vmem:[#allocation14 + $0x20] sm:$0xff]
    %v864 = vld [vmem:[#allocation14 + $0x28] sm:$0xff]
    %v865 = vld [vmem:[#allocation14 + $0x30] sm:$0xff]
    %v866 = vld [vmem:[#allocation14 + $0x38] sm:$0xff]
    %v867 = vld [vmem:[#allocation14 + $0x40] sm:$0xff]
    %v868 = vld [vmem:[#allocation14 + $0x48] sm:$0xff]
    %v869 = vld [vmem:[#allocation14 + $0x50] sm:$0xff]
    %v870 = vld [vmem:[#allocation14 + $0x58] sm:$0xff]
    %v871 = vld [vmem:[#allocation14 + $0x60] sm:$0xff]
    %v872 = vld [vmem:[#allocation14 + $0x68] sm:$0xff]
    %v873 = vld [vmem:[#allocation14 + $0x70] sm:$0xff]
    %v874 = vld [vmem:[#allocation14 + $0x78] sm:$0xff]
    %v875 = vld [vmem:[%s10] sm:$0x1]
    %v877 = vlaneseq
    %v878 = vshrl.u32 %v877, 7
    %v879 = vsub.s32 0, %v878
    %v880 = vrot.slane %v875, %v879
    %882 = vmatprep.subr.mxu0 0.0
    %883 = vmatpush1.msra.mxu0 %v874
    %884 = vmatprep.subr.mxu0 0.0
    %885 = vmatpush1.msra.mxu0 %v873
    %886 = vmatprep.subr.mxu0 0.0
    %887 = vmatpush1.msra.mxu0 %v872
    %888 = vmatprep.subr.mxu0 0.0
    %889 = vmatpush1.msra.mxu0 %v871
    %890 = vmatprep.subr.mxu0 0.0
    %891 = vmatpush1.msra.mxu0 %v870
    %892 = vmatprep.subr.mxu0 0.0
    %893 = vmatpush1.msra.mxu0 %v869
    %894 = vmatprep.subr.mxu0 0.0
    %895 = vmatpush1.msra.mxu0 %v868
    %896 = vmatprep.subr.mxu0 0.0
    %897 = vmatpush1.msra.mxu0 %v867
    %898 = vmatprep.subr.mxu0 0.0
    %899 = vmatpush1.msra.mxu0 %v866
    %900 = vmatprep.subr.mxu0 0.0
    %901 = vmatpush1.msra.mxu0 %v865
    %902 = vmatprep.subr.mxu0 0.0
    %903 = vmatpush1.msra.mxu0 %v864
    %904 = vmatprep.subr.mxu0 0.0
    %905 = vmatpush1.msra.mxu0 %v863
    %906 = vmatprep.subr.mxu0 0.0
    %907 = vmatpush1.msra.mxu0 %v862
    %908 = vmatprep.subr.mxu0 0.0
    %909 = vmatpush1.msra.mxu0 %v861
    %910 = vmatprep.subr.mxu0 0.0
    %911 = vmatpush1.msra.mxu0 %v860
    %912 = vmatprep.subr.mxu0 0.0
    %913 = vmatpush1.msra.mxu0 %v859
    %914 = vmatprep.subr.mxu0 0.0
    %915 = vmatpush2.msra.mxu0 0.0
    %916 = vmatprep.subr.mxu0 0.0
    %917 = vmatpush2.msra.mxu0 0.0
    %918 = vmatprep.subr.mxu0 0.0
    %919 = vmatpush2.msra.mxu0 0.0
    %920 = vmatprep.subr.mxu0 0.0
    %921 = vmatpush2.msra.mxu0 0.0
    %922 = vmatprep.subr.mxu0 0.0
    %923 = vmatpush2.msra.mxu0 0.0
    %924 = vmatprep.subr.mxu0 0.0
    %925 = vmatpush2.msra.mxu0 0.0
    %926 = vmatprep.subr.mxu0 0.0
    %927 = vmatpush2.msra.mxu0 0.0
    %928 = vmatprep.subr.mxu0 0.0
    %929 = vmatpush2.msra.mxu0 0.0
    %930 = vmatprep.subr.mxu0 0.0
    %931 = vmatpush2.msra.mxu0 0.0
    %932 = vmatprep.subr.mxu0 0.0
    %933 = vmatpush2.msra.mxu0 0.0
    %934 = vmatprep.subr.mxu0 0.0
    %935 = vmatpush2.msra.mxu0 0.0
    %936 = vmatprep.subr.mxu0 0.0
    %937 = vmatpush2.msra.mxu0 0.0
    %938 = vmatprep.subr.mxu0 0.0
    %939 = vmatpush2.msra.mxu0 0.0
    %940 = vmatprep.subr.mxu0 0.0
    %941 = vmatpush2.msra.mxu0 0.0
    %942 = vmatprep.subr.mxu0 0.0
    %943 = vmatpush2.msra.mxu0 0.0
    %944 = vmatprep.subr.mxu0 0.0
    %945 = vmatpush2.msra.mxu0 0.0
    %946 = vmatprep.mubr.f32.mxu0 0.0
    %947 = vmatmul.mubr.f32.gmra.mxu0 %v858
    %v948 = vpop.f32.mrf.mxu0
    %v949 = vadd.f32 %v880, %v948
    %v950 = vpop.f32.mrf.mxu0
    %951 = vdwg.mxu0
    %v952 = vmax.f32 %v949, -100.0
    %v953 = vmin.f32 %v952, 100.0
    %v954 = vld [vmem:[#allocation16] sm:$0xff]
    %v955 = vld [vmem:[#allocation16 + $0x8] sm:$0xff]
    %v956 = vld [vmem:[#allocation16 + $0x10] sm:$0xff]
    %v957 = vld [vmem:[#allocation16 + $0x18] sm:$0xff]
    %v958 = vld [vmem:[#allocation16 + $0x20] sm:$0xff]
    %v959 = vld [vmem:[#allocation16 + $0x28] sm:$0xff]
    %v960 = vld [vmem:[#allocation16 + $0x30] sm:$0xff]
    %v961 = vld [vmem:[#allocation16 + $0x38] sm:$0xff]
    %v962 = vld [vmem:[#allocation16 + $0x40] sm:$0xff]
    %v963 = vld [vmem:[#allocation16 + $0x48] sm:$0xff]
    %v964 = vld [vmem:[#allocation16 + $0x50] sm:$0xff]
    %v965 = vld [vmem:[#allocation16 + $0x58] sm:$0xff]
    %v966 = vld [vmem:[#allocation16 + $0x60] sm:$0xff]
    %v967 = vld [vmem:[#allocation16 + $0x68] sm:$0xff]
    %v968 = vld [vmem:[#allocation16 + $0x70] sm:$0xff]
    %v969 = vld [vmem:[#allocation16 + $0x78] sm:$0xff]
    %970 = vmatprep.subr.mxu0 0.0
    %971 = vmatpush1.msra.mxu0 %v969
    %972 = vmatprep.subr.mxu0 0.0
    %973 = vmatpush1.msra.mxu0 %v968
    %974 = vmatprep.subr.mxu0 0.0
    %975 = vmatpush1.msra.mxu0 %v967
    %976 = vmatprep.subr.mxu0 0.0
    %977 = vmatpush1.msra.mxu0 %v966
    %978 = vmatprep.subr.mxu0 0.0
    %979 = vmatpush1.msra.mxu0 %v965
    %980 = vmatprep.subr.mxu0 0.0
    %981 = vmatpush1.msra.mxu0 %v964
    %982 = vmatprep.subr.mxu0 0.0
    %983 = vmatpush1.msra.mxu0 %v963
    %984 = vmatprep.subr.mxu0 0.0
    %985 = vmatpush1.msra.mxu0 %v962
    %986 = vmatprep.subr.mxu0 0.0
    %987 = vmatpush1.msra.mxu0 %v961
    %988 = vmatprep.subr.mxu0 0.0
    %989 = vmatpush1.msra.mxu0 %v960
    %990 = vmatprep.subr.mxu0 0.0
    %991 = vmatpush1.msra.mxu0 %v959
    %992 = vmatprep.subr.mxu0 0.0
    %993 = vmatpush1.msra.mxu0 %v958
    %994 = vmatprep.subr.mxu0 0.0
    %995 = vmatpush1.msra.mxu0 %v957
    %996 = vmatprep.subr.mxu0 0.0
    %997 = vmatpush1.msra.mxu0 %v956
    %998 = vmatprep.subr.mxu0 0.0
    %999 = vmatpush1.msra.mxu0 %v955
    %1000 = vmatprep.subr.mxu0 0.0
    %1001 = vmatpush1.msra.mxu0 %v954
    %1002 = vmatprep.subr.mxu0 0.0
    %1003 = vmatpush2.msra.mxu0 0.0
    %1004 = vmatprep.subr.mxu0 0.0
    %1005 = vmatpush2.msra.mxu0 0.0
    %1006 = vmatprep.subr.mxu0 0.0
    %1007 = vmatpush2.msra.mxu0 0.0
    %1008 = vmatprep.subr.mxu0 0.0
    %1009 = vmatpush2.msra.mxu0 0.0
    %1010 = vmatprep.subr.mxu0 0.0
    %1011 = vmatpush2.msra.mxu0 0.0
    %1012 = vmatprep.subr.mxu0 0.0
    %1013 = vmatpush2.msra.mxu0 0.0
    %1014 = vmatprep.subr.mxu0 0.0
    %1015 = vmatpush2.msra.mxu0 0.0
    %1016 = vmatprep.subr.mxu0 0.0
    %1017 = vmatpush2.msra.mxu0 0.0
    %1018 = vmatprep.subr.mxu0 0.0
    %1019 = vmatpush2.msra.mxu0 0.0
    %1020 = vmatprep.subr.mxu0 0.0
    %1021 = vmatpush2.msra.mxu0 0.0
    %1022 = vmatprep.subr.mxu0 0.0
    %1023 = vmatpush2.msra.mxu0 0.0
    %1024 = vmatprep.subr.mxu0 0.0
    %1025 = vmatpush2.msra.mxu0 0.0
    %1026 = vmatprep.subr.mxu0 0.0
    %1027 = vmatpush2.msra.mxu0 0.0
    %1028 = vmatprep.subr.mxu0 0.0
    %1029 = vmatpush2.msra.mxu0 0.0
    %1030 = vmatprep.subr.mxu0 0.0
    %1031 = vmatpush2.msra.mxu0 0.0
    %1032 = vmatprep.subr.mxu0 0.0
    %1033 = vmatpush2.msra.mxu0 0.0
    %1034 = vmatprep.mubr.f32.mxu0 0.0
    %1035 = vmatmul.mubr.f32.gmra.mxu0 %v953
    %v1036 = vpop.f32.mrf.mxu0
    %v1037 = vadd.f32 0.0, %v1036
    %v1038 = vpop.f32.mrf.mxu0
    %1039 = vdwg.mxu0
    %v1040 = vmax.f32 %v1037, -100.0
    %v1041 = vmin.f32 %v1040, 100.0
    %1042 = vst [vmem:[#allocation17] sm:$0xff] %v1041
    // Predicated region
    $region86: #{tpu_custom_call.1} parent=1 // pred_check
      _
    $region87: #{tpu_custom_call.1} parent=1 // pred_check_branch
      %1044 = sbr.rel (0) target = $region89
    $region88: #{tpu_custom_call.1} parent=1 // pred_region
      %s1046 = ssub.s32 128, 128
      %1047 = vsyncadd [#allocation4], %s1046
      %s1049 = sshll.u32 [#allocation17], 4
      %s1050 = int_to_ptr.vmem [resolvable:$true] %s1049
      %1052 = dma.vmem_to_hbm [thread:$0]  %s1050, 128, %s12, [#allocation4]
    $region89: #{tpu_custom_call.1} parent=1 // pred_fallthru
      _
    // Predicated region
    $region90: #{tpu_custom_call.1} parent=1 // pred_check
      _
    $region91: #{tpu_custom_call.1} parent=1 // pred_check_branch
      %1054 = sbr.rel (0) target = $region93
    $region92: #{tpu_custom_call.1} parent=1 // pred_region
      %1055 = dma.done [#allocation4], 128
    $region93: #{tpu_custom_call.1} parent=1 // pred_fallthru
      _
    %1056 = vsyncpa [#allocation3], 1
    %1057 = vsyncpa [#allocation6], 1
    %1058 = vsyncpa [#allocation9], 1
    %1059 = vsyncpa [#allocation12], 1
    %1060 = vsyncpa [#allocation15], 1
    %1061 = vsyncpa [#allocation4], 1

// kernel: tpu_custom_call.1
$region0: #{tpu_custom_call.1}
  #allocation0 [shape = 'u32[]', space=smem, size = 0x4, offset = 0x4, fixed_abs, tag = 'smem constant byte address 0x4 - core index']
  #allocation1 [shape = 'u32[144,128]{1,0:T(1,128)}', space=vmem, size = 0x12000, scoped, tag = 'internal scratch']
  %s0 = inlined_call_operand.hbm [shape: f32[8,32], index: 0, kind: input, shape index: {}]
  %s1 = inlined_call_operand.hbm [shape: f32[32,128], index: 1, kind: input, shape index: {}]
  %s2 = inlined_call_operand.vmem [shape: f32[1,128], index: 2, kind: input, shape index: {}]
  %s3 = inlined_call_operand.hbm [shape: f32[1,128], index: 3, kind: input, shape index: {}]
  %s4 = inlined_call_operand.hbm [shape: f32[1,128], index: 4, kind: input, shape index: {}]
  %s5 = inlined_call_operand.vmem [shape: f32[5,128], index: 5, kind: input, shape index: {}]
  %s6 = inlined_call_operand.hbm [shape: f32[5,128], index: 6, kind: input, shape index: {}]
  %s7 = inlined_call_operand.hbm [shape: f32[128,128], index: 7, kind: input, shape index: {}]
  %s8 = inlined_call_operand.hbm [shape: f32[128,128], index: 8, kind: input, shape index: {}]
  %s9 = inlined_call_operand.hbm [shape: f32[128,128], index: 9, kind: input, shape index: {}]
  %s10 = inlined_call_operand.vmem [shape: f32[1,128], index: 10, kind: input, shape index: {}]
  %s11 = inlined_call_operand.hbm [shape: f32[128,128], index: 11, kind: input, shape index: {}]
  %s12 = inlined_call_operand.hbm [shape: f32[8,128], index: 12, kind: output, shape index: {}]
  %s13 = sld [smem:[#allocation0]]
  $region94: #{tpu_custom_call.1} parent=0
    _
  %s15 = ssub.s32 1, %s13
  %s16 = scalar_select 0, %s15, %s13
  $region1: #{tpu_custom_call.1} parent=0
    #allocation2 [shape = 'u8[4096]{0}', space=vmem, size = 0x1000, scoped, tag = 'input window, operand 0, single buffered']
    #allocation3 [shape = 's32[1]{0}', space=sflag, size = 0x4, scoped, tag = 'scoped memory for tpu_custom_call.1']
    #allocation4 [shape = 's32[1]{0}', space=sflag, size = 0x4, scoped, tag = 'scoped memory for tpu_custom_call.1']
    #allocation5 [shape = 'u8[16384]{0}', space=vmem, size = 0x4000, scoped, tag = 'input window, operand 1, single buffered']
    #allocation6 [shape = 's32[1]{0}', space=sflag, size = 0x4, scoped, tag = 'scoped memory for tpu_custom_call.1']
    #allocation7 [shape = 'u8[512]{0}', space=vmem, size = 0x400, scoped, tag = 'input window, operand 3, single buffered']
    #allocation8 [shape = 'u8[512]{0}', space=vmem, size = 0x400, scoped, tag = 'input window, operand 4, single buffered']
    #allocation9 [shape = 's32[1]{0}', space=sflag, size = 0x4, scoped, tag = 'scoped memory for tpu_custom_call.1']
    #allocation10 [shape = 'u8[4096]{0}', space=vmem, size = 0x1000, scoped, tag = 'input window, operand 6, single buffered']
    #allocation11 [shape = 'u8[65536]{0}', space=vmem, size = 0x10000, scoped, tag = 'input window, operand 7, single buffered']
    #allocation12 [shape = 's32[1]{0}', space=sflag, size = 0x4, scoped, tag = 'scoped memory for tpu_custom_call.1']
    #allocation13 [shape = 'u8[65536]{0}', space=vmem, size = 0x10000, scoped, tag = 'input window, operand 8, single buffered']
    #allocation14 [shape = 'u8[65536]{0}', space=vmem, size = 0x10000, scoped, tag = 'input window, operand 9, single buffered']
    #allocation15 [shape = 's32[1]{0}', space=sflag, size = 0x4, scoped, tag = 'scoped memory for tpu_custom_call.1']
    #allocation16 [shape = 'u8[65536]{0}', space=vmem, size = 0x10000, scoped, tag = 'input window, operand 11, single buffered']
    #allocation17 [shape = 'u8[4096]{0}', space=vmem, size = 0x1000, scoped, tag = 'output window, operand 0, single buffered']
    %17 = vsyncpa [#allocation3], 0
    %18 = vsyncpa [#allocation6], 0
    %19 = vsyncpa [#allocation9], 0
    %20 = vsyncpa [#allocation12], 0
    %21 = vsyncpa [#allocation15], 0
    %22 = vsyncpa [#allocation4], 0
    // Predicated region
    $region2: #{tpu_custom_call.1} parent=1 // pred_check
      _
    $region3: #{tpu_custom_call.1} parent=1 // pred_check_branch
      %24 = sbr.rel (0) target = $region5
    $region4: #{tpu_custom_call.1} parent=1 // pred_region
      %s26 = ssub.s32 128, 128
      %27 = vsyncadd [#allocation3], %s26
      %s29 = sshll.u32 [#allocation2], 4
      %s30 = int_to_ptr.vmem [resolvable:$true] %s29
      %32 = dma.hbm_to_vmem [thread:$0]  %s0, 128, %s30, [#allocation3]
    $region5: #{tpu_custom_call.1} parent=1 // pred_fallthru
      _
    // Predicated region
    $region6: #{tpu_custom_call.1} parent=1 // pred_check
      _
    $region7: #{tpu_custom_call.1} parent=1 // pred_check_branch
      %34 = sbr.rel (0) target = $region9
    $region8: #{tpu_custom_call.1} parent=1 // pred_region
      %s36 = ssub.s32 512, 512
      %37 = vsyncadd [#allocation6], %s36
      %s38 = sshll.u32 [#allocation5], 4
      %s39 = int_to_ptr.vmem [resolvable:$true] %s38
      %44 = dma.hbm_to_vmem [thread:$0]  %s1, 512, %s39, [#allocation6], 128, 128, 8
    $region9: #{tpu_custom_call.1} parent=1 // pred_fallthru
      _
    // Predicated region
    $region10: #{tpu_custom_call.1} parent=1 // pred_check
      _
    $region11: #{tpu_custom_call.1} parent=1 // pred_check_branch
      %46 = sbr.rel (0) target = $region13
    $region12: #{tpu_custom_call.1} parent=1 // pred_region
      _
    $region13: #{tpu_custom_call.1} parent=1 // pred_fallthru
      _
    // Predicated region
    $region14: #{tpu_custom_call.1} parent=1 // pred_check
      _
    $region15: #{tpu_custom_call.1} parent=1 // pred_check_branch
      %48 = sbr.rel (0) target = $region17
    $region16: #{tpu_custom_call.1} parent=1 // pred_region
      %s50 = ssub.s32 16, 16
      %51 = vsyncadd [#allocation6], %s50
      %s53 = sshll.u32 [#allocation7], 4
      %s54 = int_to_ptr.vmem [resolvable:$true] %s53
      %56 = dma.hbm_to_vmem [thread:$0]  %s3, 16, %s54, [#allocation6]
    $region17: #{tpu_custom_call.1} parent=1 // pred_fallthru
      _
    // Predicated region
    $region18: #{tpu_custom_call.1} parent=1 // pred_check
      _
    $region19: #{tpu_custom_call.1} parent=1 // pred_check_branch
      %58 = sbr.rel (0) target = $region21
    $region20: #{tpu_custom_call.1} parent=1 // pred_region
      %s60 = ssub.s32 16, 16
      %61 = vsyncadd [#allocation9], %s60
      %s63 = sshll.u32 [#allocation8], 4
      %s64 = int_to_ptr.vmem [resolvable:$true] %s63
      %66 = dma.hbm_to_vmem [thread:$0]  %s4, 16, %s64, [#allocation9]
    $region21: #{tpu_custom_call.1} parent=1 // pred_fallthru
      _
    // Predicated region
    $region22: #{tpu_custom_call.1} parent=1 // pred_check
      _
    $region23: #{tpu_custom_call.1} parent=1 // pred_check_branch
      %68 = sbr.rel (0) target = $region25
    $region24: #{tpu_custom_call.1} parent=1 // pred_region
      _
    $region25: #{tpu_custom_call.1} parent=1 // pred_fallthru
      _
    // Predicated region
    $region26: #{tpu_custom_call.1} parent=1 // pred_check
      _
    $region27: #{tpu_custom_call.1} parent=1 // pred_check_branch
      %70 = sbr.rel (0) target = $region29
    $region28: #{tpu_custom_call.1} parent=1 // pred_region
      %s72 = ssub.s32 128, 128
      %73 = vsyncadd [#allocation9], %s72
      %s75 = sshll.u32 [#allocation10], 4
      %s76 = int_to_ptr.vmem [resolvable:$true] %s75
      %78 = dma.hbm_to_vmem [thread:$0]  %s6, 128, %s76, [#allocation9]
    $region29: #{tpu_custom_call.1} parent=1 // pred_fallthru
      _
    // Predicated region
    $region30: #{tpu_custom_call.1} parent=1 // pred_check
      _
    $region31: #{tpu_custom_call.1} parent=1 // pred_check_branch
      %80 = sbr.rel (0) target = $region33
    $region32: #{tpu_custom_call.1} parent=1 // pred_region
      %s82 = ssub.s32 2048, 2048
      %83 = vsyncadd [#allocation12], %s82
      %s84 = sshll.u32 [#allocation11], 4
      %s85 = int_to_ptr.vmem [resolvable:$true] %s84
      %90 = dma.hbm_to_vmem [thread:$0]  %s7, 2048, %s85, [#allocation12], 128, 128, 8
    $region33: #{tpu_custom_call.1} parent=1 // pred_fallthru
      _
    // Predicated region
    $region34: #{tpu_custom_call.1} parent=1 // pred_check
      _
    $region35: #{tpu_custom_call.1} parent=1 // pred_check_branch
      %92 = sbr.rel (0) target = $region37
    $region36: #{tpu_custom_call.1} parent=1 // pred_region
      %s94 = ssub.s32 2048, 2048
      %95 = vsyncadd [#allocation12], %s94
      %s96 = sshll.u32 [#allocation13], 4
      %s97 = int_to_ptr.vmem [resolvable:$true] %s96
      %102 = dma.hbm_to_vmem [thread:$0]  %s8, 2048, %s97, [#allocation12], 128, 128, 8
    $region37: #{tpu_custom_call.1} parent=1 // pred_fallthru
      _
    // Predicated region
    $region38: #{tpu_custom_call.1} parent=1 // pred_check
      _
    $region39: #{tpu_custom_call.1} parent=1 // pred_check_branch
      %104 = sbr.rel (0) target = $region41
    $region40: #{tpu_custom_call.1} parent=1 // pred_region
      %s106 = ssub.s32 2048, 2048
      %107 = vsyncadd [#allocation15], %s106
      %s108 = sshll.u32 [#allocation14], 4
      %s109 = int_to_ptr.vmem [resolvable:$true] %s108
      %114 = dma.hbm_to_vmem [thread:$0]  %s9, 2048, %s109, [#allocation15], 128, 128, 8
    $region41: #{tpu_custom_call.1} parent=1 // pred_fallthru
      _
    // Predicated region
    $region42: #{tpu_custom_call.1} parent=1 // pred_check
      _
    $region43: #{tpu_custom_call.1} parent=1 // pred_check_branch
      %116 = sbr.rel (0) target = $region45
    $region44: #{tpu_custom_call.1} parent=1 // pred_region
      _
    $region45: #{tpu_custom_call.1} parent=1 // pred_fallthru
      _
    // Predicated region
    $region46: #{tpu_custom_call.1} parent=1 // pred_check
      _
    $region47: #{tpu_custom_call.1} parent=1 // pred_check_branch
      %118 = sbr.rel (0) target = $region49
    $region48: #{tpu_custom_call.1} parent=1 // pred_region
      %s120 = ssub.s32 2048, 2048
      %121 = vsyncadd [#allocation15], %s120
      %s122 = sshll.u32 [#allocation16], 4
      %s123 = int_to_ptr.vmem [resolvable:$true] %s122
      %128 = dma.hbm_to_vmem [thread:$0]  %s11, 2048, %s123, [#allocation15], 128, 128, 8
    $region49: #{tpu_custom_call.1} parent=1 // pred_fallthru
      _
    // Predicated region
    $region50: #{tpu_custom_call.1} parent=1 // pred_check
      _
    $region51: #{tpu_custom_call.1} parent=1 // pred_check_branch
      %130 = sbr.rel (0) target = $region53
    $region52: #{tpu_custom_call.1} parent=1 // pred_region
      %131 = dma.done [#allocation3], 128
    $region53: #{tpu_custom_call.1} parent=1 // pred_fallthru
      _
    // Predicated region
    $region54: #{tpu_custom_call.1} parent=1 // pred_check
      _
    $region55: #{tpu_custom_call.1} parent=1 // pred_check_branch
      %133 = sbr.rel (0) target = $region57
    $region56: #{tpu_custom_call.1} parent=1 // pred_region
      %134 = dma.done [#allocation6], 512
    $region57: #{tpu_custom_call.1} parent=1 // pred_fallthru
      _
    // Predicated region
    $region58: #{tpu_custom_call.1} parent=1 // pred_check
      _
    $region59: #{tpu_custom_call.1} parent=1 // pred_check_branch
      %136 = sbr.rel (0) target = $region61
    $region60: #{tpu_custom_call.1} parent=1 // pred_region
      %137 = dma.done [#allocation6], 16
    $region61: #{tpu_custom_call.1} parent=1 // pred_fallthru
      _
    // Predicated region
    $region62: #{tpu_custom_call.1} parent=1 // pred_check
      _
    $region63: #{tpu_custom_call.1} parent=1 // pred_check_branch
      %139 = sbr.rel (0) target = $region65
    $region64: #{tpu_custom_call.1} parent=1 // pred_region
      %140 = dma.done [#allocation9], 16
    $region65: #{tpu_custom_call.1} parent=1 // pred_fallthru
      _
    // Predicated region
    $region66: #{tpu_custom_call.1} parent=1 // pred_check
      _
    $region67: #{tpu_custom_call.1} parent=1 // pred_check_branch
      %142 = sbr.rel (0) target = $region69
    $region68: #{tpu_custom_call.1} parent=1 // pred_region
      %143 = dma.done [#allocation9], 128
    $region69: #{tpu_custom_call.1} parent=1 // pred_fallthru
      _
    // Predicated region
    $region70: #{tpu_custom_call.1} parent=1 // pred_check
      _
    $region71: #{tpu_custom_call.1} parent=1 // pred_check_branch
      %145 = sbr.rel (0) target = $region73
    $region72: #{tpu_custom_call.1} parent=1 // pred_region
      %146 = dma.done [#allocation12], 2048
    $region73: #{tpu_custom_call.1} parent=1 // pred_fallthru
      _
    // Predicated region
    $region74: #{tpu_custom_call.1} parent=1 // pred_check
      _
    $region75: #{tpu_custom_call.1} parent=1 // pred_check_branch
      %148 = sbr.rel (0) target = $region77
    $region76: #{tpu_custom_call.1} parent=1 // pred_region
      %149 = dma.done [#allocation12], 2048
    $region77: #{tpu_custom_call.1} parent=1 // pred_fallthru
      _
    // Predicated region
    $region78: #{tpu_custom_call.1} parent=1 // pred_check
      _
    $region79: #{tpu_custom_call.1} parent=1 // pred_check_branch
      %151 = sbr.rel (0) target = $region81
    $region80: #{tpu_custom_call.1} parent=1 // pred_region
      %152 = dma.done [#allocation15], 2048
    $region81: #{tpu_custom_call.1} parent=1 // pred_fallthru
      _
    // Predicated region
    $region82: #{tpu_custom_call.1} parent=1 // pred_check
      _
    $region83: #{tpu_custom_call.1} parent=1 // pred_check_branch
      %154 = sbr.rel (0) target = $region85
    $region84: #{tpu_custom_call.1} parent=1 // pred_region
      %155 = dma.done [#allocation15], 2048
    $region85: #{tpu_custom_call.1} parent=1 // pred_fallthru
      _
    %v156 = vld [vmem:[#allocation2] sm:$0xff]
    %v157 = vld [vmem:[#allocation5] sm:$0xff]
    %v158 = vld [vmem:[#allocation5 + $0x8] sm:$0xff]
    %v159 = vld [vmem:[#allocation5 + $0x10] sm:$0xff]
    %v160 = vld [vmem:[#allocation5 + $0x18] sm:$0xff]
    %v161 = vld [vmem:[%s2] sm:$0x1]
    %v163 = vlaneseq
    %v164 = vshrl.u32 %v163, 7
    %v165 = vsub.s32 0, %v164
    %v166 = vrot.slane %v161, %v165
    %vm168 = vcmask 261120
    %v170 = vsel %vm168, %v156, 0
    %172 = vmatprep.subr.mxu0 0.0
    %173 = vmatpush1.msra.mxu0 0.0
    %174 = vmatprep.subr.mxu0 0.0
    %175 = vmatpush1.msra.mxu0 0.0
    %176 = vmatprep.subr.mxu0 0.0
    %177 = vmatpush1.msra.mxu0 0.0
    %178 = vmatprep.subr.mxu0 0.0
    %179 = vmatpush1.msra.mxu0 0.0
    %180 = vmatprep.subr.mxu0 0.0
    %181 = vmatpush1.msra.mxu0 0.0
    %182 = vmatprep.subr.mxu0 0.0
    %183 = vmatpush1.msra.mxu0 0.0
    %184 = vmatprep.subr.mxu0 0.0
    %185 = vmatpush1.msra.mxu0 0.0
    %186 = vmatprep.subr.mxu0 0.0
    %187 = vmatpush1.msra.mxu0 0.0
    %188 = vmatprep.subr.mxu0 0.0
    %189 = vmatpush1.msra.mxu0 0.0
    %190 = vmatprep.subr.mxu0 0.0
    %191 = vmatpush1.msra.mxu0 0.0
    %192 = vmatprep.subr.mxu0 0.0
    %193 = vmatpush1.msra.mxu0 0.0
    %194 = vmatprep.subr.mxu0 0.0
    %195 = vmatpush1.msra.mxu0 0.0
    %196 = vmatprep.subr.mxu0 0.0
    %197 = vmatpush1.msra.mxu0 %v160
    %198 = vmatprep.subr.mxu0 0.0
    %199 = vmatpush1.msra.mxu0 %v159
    %200 = vmatprep.subr.mxu0 0.0
    %201 = vmatpush1.msra.mxu0 %v158
    %202 = vmatprep.subr.mxu0 0.0
    %203 = vmatpush1.msra.mxu0 %v157
    %204 = vmatprep.subr.mxu0 0.0
    %205 = vmatpush2.msra.mxu0 0.0
    %206 = vmatprep.subr.mxu0 0.0
    %207 = vmatpush2.msra.mxu0 0.0
    %208 = vmatprep.subr.mxu0 0.0
    %209 = vmatpush2.msra.mxu0 0.0
    %210 = vmatprep.subr.mxu0 0.0
    %211 = vmatpush2.msra.mxu0 0.0
    %212 = vmatprep.subr.mxu0 0.0
    %213 = vmatpush2.msra.mxu0 0.0
    %214 = vmatprep.subr.mxu0 0.0
    %215 = vmatpush2.msra.mxu0 0.0
    %216 = vmatprep.subr.mxu0 0.0
    %217 = vmatpush2.msra.mxu0 0.0
    %218 = vmatprep.subr.mxu0 0.0
    %219 = vmatpush2.msra.mxu0 0.0
    %220 = vmatprep.subr.mxu0 0.0
    %221 = vmatpush2.msra.mxu0 0.0
    %222 = vmatprep.subr.mxu0 0.0
    %223 = vmatpush2.msra.mxu0 0.0
    %224 = vmatprep.subr.mxu0 0.0
    %225 = vmatpush2.msra.mxu0 0.0
    %226 = vmatprep.subr.mxu0 0.0
    %227 = vmatpush2.msra.mxu0 0.0
    %228 = vmatprep.subr.mxu0 0.0
    %229 = vmatpush2.msra.mxu0 0.0
    %230 = vmatprep.subr.mxu0 0.0
    %231 = vmatpush2.msra.mxu0 0.0
    %232 = vmatprep.subr.mxu0 0.0
    %233 = vmatpush2.msra.mxu0 0.0
    %234 = vmatprep.subr.mxu0 0.0
    %235 = vmatpush2.msra.mxu0 0.0
    %236 = vmatprep.mubr.f32.mxu0 0.0
    %237 = vmatmul.mubr.f32.gmra.mxu0 %v170
    %v238 = vpop.f32.mrf.mxu0
    %v239 = vadd.f32 %v166, %v238
    %v240 = vpop.f32.mrf.mxu0
    %241 = vdwg.mxu0
    %v242 = vld [vmem:[#allocation11] sm:$0xff]
    %v243 = vld [vmem:[#allocation11 + $0x8] sm:$0xff]
    %v244 = vld [vmem:[#allocation11 + $0x10] sm:$0xff]
    %v245 = vld [vmem:[#allocation11 + $0x18] sm:$0xff]
    %v246 = vld [vmem:[#allocation11 + $0x20] sm:$0xff]
    %v247 = vld [vmem:[#allocation11 + $0x28] sm:$0xff]
    %v248 = vld [vmem:[#allocation11 + $0x30] sm:$0xff]
    %v249 = vld [vmem:[#allocation11 + $0x38] sm:$0xff]
    %v250 = vld [vmem:[#allocation11 + $0x40] sm:$0xff]
    %v251 = vld [vmem:[#allocation11 + $0x48] sm:$0xff]
    %v252 = vld [vmem:[#allocation11 + $0x50] sm:$0xff]
    %v253 = vld [vmem:[#allocation11 + $0x58] sm:$0xff]
    %v254 = vld [vmem:[#allocation11 + $0x60] sm:$0xff]
    %v255 = vld [vmem:[#allocation11 + $0x68] sm:$0xff]
    %v256 = vld [vmem:[#allocation11 + $0x70] sm:$0xff]
    %v257 = vld [vmem:[#allocation11 + $0x78] sm:$0xff]
    %v258 = vld [vmem:[#allocation13] sm:$0xff]
    %v259 = vld [vmem:[#allocation13 + $0x8] sm:$0xff]
    %v260 = vld [vmem:[#allocation13 + $0x10] sm:$0xff]
    %v261 = vld [vmem:[#allocation13 + $0x18] sm:$0xff]
    %v262 = vld [vmem:[#allocation13 + $0x20] sm:$0xff]
    %v263 = vld [vmem:[#allocation13 + $0x28] sm:$0xff]
    %v264 = vld [vmem:[#allocation13 + $0x30] sm:$0xff]
    %v265 = vld [vmem:[#allocation13 + $0x38] sm:$0xff]
    %v266 = vld [vmem:[#allocation13 + $0x40] sm:$0xff]
    %v267 = vld [vmem:[#allocation13 + $0x48] sm:$0xff]
    %v268 = vld [vmem:[#allocation13 + $0x50] sm:$0xff]
    %v269 = vld [vmem:[#allocation13 + $0x58] sm:$0xff]
    %v270 = vld [vmem:[#allocation13 + $0x60] sm:$0xff]
    %v271 = vld [vmem:[#allocation13 + $0x68] sm:$0xff]
    %v272 = vld [vmem:[#allocation13 + $0x70] sm:$0xff]
    %v273 = vld [vmem:[#allocation13 + $0x78] sm:$0xff]
    %274 = vmatprep.subr.mxu0 0.0
    %275 = vmatpush1.msra.mxu0 %v257
    %276 = vmatprep.subr.mxu0 0.0
    %277 = vmatpush1.msra.mxu0 %v256
    %278 = vmatprep.subr.mxu0 0.0
    %279 = vmatpush1.msra.mxu0 %v255
    %280 = vmatprep.subr.mxu0 0.0
    %281 = vmatpush1.msra.mxu0 %v254
    %282 = vmatprep.subr.mxu0 0.0
    %283 = vmatpush1.msra.mxu0 %v253
    %284 = vmatprep.subr.mxu0 0.0
    %285 = vmatpush1.msra.mxu0 %v252
    %286 = vmatprep.subr.mxu0 0.0
    %287 = vmatpush1.msra.mxu0 %v251
    %288 = vmatprep.subr.mxu0 0.0
    %289 = vmatpush1.msra.mxu0 %v250
    %290 = vmatprep.subr.mxu0 0.0
    %291 = vmatpush1.msra.mxu0 %v249
    %292 = vmatprep.subr.mxu0 0.0
    %293 = vmatpush1.msra.mxu0 %v248
    %294 = vmatprep.subr.mxu0 0.0
    %295 = vmatpush1.msra.mxu0 %v247
    %296 = vmatprep.subr.mxu0 0.0
    %297 = vmatpush1.msra.mxu0 %v246
    %298 = vmatprep.subr.mxu0 0.0
    %299 = vmatpush1.msra.mxu0 %v245
    %300 = vmatprep.subr.mxu0 0.0
    %301 = vmatpush1.msra.mxu0 %v244
    %302 = vmatprep.subr.mxu0 0.0
    %303 = vmatpush1.msra.mxu0 %v243
    %304 = vmatprep.subr.mxu0 0.0
    %305 = vmatpush1.msra.mxu0 %v242
    %306 = vmatprep.subr.mxu0 0.0
    %307 = vmatpush2.msra.mxu0 0.0
    %308 = vmatprep.subr.mxu0 0.0
    %309 = vmatpush2.msra.mxu0 0.0
    %310 = vmatprep.subr.mxu0 0.0
    %311 = vmatpush2.msra.mxu0 0.0
    %312 = vmatprep.subr.mxu0 0.0
    %313 = vmatpush2.msra.mxu0 0.0
    %314 = vmatprep.subr.mxu0 0.0
    %315 = vmatpush2.msra.mxu0 0.0
    %316 = vmatprep.subr.mxu0 0.0
    %317 = vmatpush2.msra.mxu0 0.0
    %318 = vmatprep.subr.mxu0 0.0
    %319 = vmatpush2.msra.mxu0 0.0
    %320 = vmatprep.subr.mxu0 0.0
    %321 = vmatpush2.msra.mxu0 0.0
    %322 = vmatprep.subr.mxu0 0.0
    %323 = vmatpush2.msra.mxu0 0.0
    %324 = vmatprep.subr.mxu0 0.0
    %325 = vmatpush2.msra.mxu0 0.0
    %326 = vmatprep.subr.mxu0 0.0
    %327 = vmatpush2.msra.mxu0 0.0
    %328 = vmatprep.subr.mxu0 0.0
    %329 = vmatpush2.msra.mxu0 0.0
    %330 = vmatprep.subr.mxu0 0.0
    %331 = vmatpush2.msra.mxu0 0.0
    %332 = vmatprep.subr.mxu0 0.0
    %333 = vmatpush2.msra.mxu0 0.0
    %334 = vmatprep.subr.mxu0 0.0
    %335 = vmatpush2.msra.mxu0 0.0
    %336 = vmatprep.subr.mxu0 0.0
    %337 = vmatpush2.msra.mxu0 0.0
    %338 = vmatprep.mubr.f32.mxu0 0.0
    %339 = vmatmul.mubr.f32.gmra.mxu0 %v239
    %v340 = vpop.f32.mrf.mxu0
    %v341 = vadd.f32 0.0, %v340
    %v342 = vpop.f32.mrf.mxu0
    %343 = vdwg.mxu0
    %344 = vmatprep.subr.mxu0 0.0
    %345 = vmatpush1.msra.mxu0 %v273
    %346 = vmatprep.subr.mxu0 0.0
    %347 = vmatpush1.msra.mxu0 %v272
    %348 = vmatprep.subr.mxu0 0.0
    %349 = vmatpush1.msra.mxu0 %v271
    %350 = vmatprep.subr.mxu0 0.0
    %351 = vmatpush1.msra.mxu0 %v270
    %352 = vmatprep.subr.mxu0 0.0
    %353 = vmatpush1.msra.mxu0 %v269
    %354 = vmatprep.subr.mxu0 0.0
    %355 = vmatpush1.msra.mxu0 %v268
    %356 = vmatprep.subr.mxu0 0.0
    %357 = vmatpush1.msra.mxu0 %v267
    %358 = vmatprep.subr.mxu0 0.0
    %359 = vmatpush1.msra.mxu0 %v266
    %360 = vmatprep.subr.mxu0 0.0
    %361 = vmatpush1.msra.mxu0 %v265
    %362 = vmatprep.subr.mxu0 0.0
    %363 = vmatpush1.msra.mxu0 %v264
    %364 = vmatprep.subr.mxu0 0.0
    %365 = vmatpush1.msra.mxu0 %v263
    %366 = vmatprep.subr.mxu0 0.0
    %367 = vmatpush1.msra.mxu0 %v262
    %368 = vmatprep.subr.mxu0 0.0
    %369 = vmatpush1.msra.mxu0 %v261
    %370 = vmatprep.subr.mxu0 0.0
    %371 = vmatpush1.msra.mxu0 %v260
    %372 = vmatprep.subr.mxu0 0.0
    %373 = vmatpush1.msra.mxu0 %v259
    %374 = vmatprep.subr.mxu0 0.0
    %375 = vmatpush1.msra.mxu0 %v258
    %376 = vmatprep.subr.mxu0 0.0
    %377 = vmatpush2.msra.mxu0 0.0
    %378 = vmatprep.subr.mxu0 0.0
    %379 = vmatpush2.msra.mxu0 0.0
    %380 = vmatprep.subr.mxu0 0.0
    %381 = vmatpush2.msra.mxu0 0.0
    %382 = vmatprep.subr.mxu0 0.0
    %383 = vmatpush2.msra.mxu0 0.0
    %384 = vmatprep.subr.mxu0 0.0
    %385 = vmatpush2.msra.mxu0 0.0
    %386 = vmatprep.subr.mxu0 0.0
    %387 = vmatpush2.msra.mxu0 0.0
    %388 = vmatprep.subr.mxu0 0.0
    %389 = vmatpush2.msra.mxu0 0.0
    %390 = vmatprep.subr.mxu0 0.0
    %391 = vmatpush2.msra.mxu0 0.0
    %392 = vmatprep.subr.mxu0 0.0
    %393 = vmatpush2.msra.mxu0 0.0
    %394 = vmatprep.subr.mxu0 0.0
    %395 = vmatpush2.msra.mxu0 0.0
    %396 = vmatprep.subr.mxu0 0.0
    %397 = vmatpush2.msra.mxu0 0.0
    %398 = vmatprep.subr.mxu0 0.0
    %399 = vmatpush2.msra.mxu0 0.0
    %400 = vmatprep.subr.mxu0 0.0
    %401 = vmatpush2.msra.mxu0 0.0
    %402 = vmatprep.subr.mxu0 0.0
    %403 = vmatpush2.msra.mxu0 0.0
    %404 = vmatprep.subr.mxu0 0.0
    %405 = vmatpush2.msra.mxu0 0.0
    %406 = vmatprep.subr.mxu0 0.0
    %407 = vmatpush2.msra.mxu0 0.0
    %408 = vmatprep.mubr.f32.mxu0 0.0
    %409 = vmatmul.mubr.f32.gmra.mxu0 %v341
    %v410 = vpop.f32.mrf.mxu0
    %v411 = vadd.f32 0.0, %v410
    %v412 = vpop.f32.mrf.mxu0
    %413 = vdwg.mxu0
    %v414 = vsub.f32 %v239, %v411
    %v415 = vmul.f32 %v414, %v414
    %416 = vmatprep.subr.mxu0 0.0
    %417 = vmatpush1.msra.mxu0 %v257
    %418 = vmatprep.subr.mxu0 0.0
    %419 = vmatpush1.msra.mxu0 %v256
    %420 = vmatprep.subr.mxu0 0.0
    %421 = vmatpush1.msra.mxu0 %v255
    %422 = vmatprep.subr.mxu0 0.0
    %423 = vmatpush1.msra.mxu0 %v254
    %424 = vmatprep.subr.mxu0 0.0
    %425 = vmatpush1.msra.mxu0 %v253
    %426 = vmatprep.subr.mxu0 0.0
    %427 = vmatpush1.msra.mxu0 %v252
    %428 = vmatprep.subr.mxu0 0.0
    %429 = vmatpush1.msra.mxu0 %v251
    %430 = vmatprep.subr.mxu0 0.0
    %431 = vmatpush1.msra.mxu0 %v250
    %432 = vmatprep.subr.mxu0 0.0
    %433 = vmatpush1.msra.mxu0 %v249
    %434 = vmatprep.subr.mxu0 0.0
    %435 = vmatpush1.msra.mxu0 %v248
    %436 = vmatprep.subr.mxu0 0.0
    %437 = vmatpush1.msra.mxu0 %v247
    %438 = vmatprep.subr.mxu0 0.0
    %439 = vmatpush1.msra.mxu0 %v246
    %440 = vmatprep.subr.mxu0 0.0
    %441 = vmatpush1.msra.mxu0 %v245
    %442 = vmatprep.subr.mxu0 0.0
    %443 = vmatpush1.msra.mxu0 %v244
    %444 = vmatprep.subr.mxu0 0.0
    %445 = vmatpush1.msra.mxu0 %v243
    %446 = vmatprep.subr.mxu0 0.0
    %447 = vmatpush1.msra.mxu0 %v242
    %448 = vmatprep.subr.mxu0 0.0
    %449 = vmatpush2.msra.mxu0 0.0
    %450 = vmatprep.subr.mxu0 0.0
    %451 = vmatpush2.msra.mxu0 0.0
    %452 = vmatprep.subr.mxu0 0.0
    %453 = vmatpush2.msra.mxu0 0.0
    %454 = vmatprep.subr.mxu0 0.0
    %455 = vmatpush2.msra.mxu0 0.0
    %456 = vmatprep.subr.mxu0 0.0
    %457 = vmatpush2.msra.mxu0 0.0
    %458 = vmatprep.subr.mxu0 0.0
    %459 = vmatpush2.msra.mxu0 0.0
    %460 = vmatprep.subr.mxu0 0.0
    %461 = vmatpush2.msra.mxu0 0.0
    %462 = vmatprep.subr.mxu0 0.0
    %463 = vmatpush2.msra.mxu0 0.0
    %464 = vmatprep.subr.mxu0 0.0
    %465 = vmatpush2.msra.mxu0 0.0
    %466 = vmatprep.subr.mxu0 0.0
    %467 = vmatpush2.msra.mxu0 0.0
    %468 = vmatprep.subr.mxu0 0.0
    %469 = vmatpush2.msra.mxu0 0.0
    %470 = vmatprep.subr.mxu0 0.0
    %471 = vmatpush2.msra.mxu0 0.0
    %472 = vmatprep.subr.mxu0 0.0
    %473 = vmatpush2.msra.mxu0 0.0
    %474 = vmatprep.subr.mxu0 0.0
    %475 = vmatpush2.msra.mxu0 0.0
    %476 = vmatprep.subr.mxu0 0.0
    %477 = vmatpush2.msra.mxu0 0.0
    %478 = vmatprep.subr.mxu0 0.0
    %479 = vmatpush2.msra.mxu0 0.0
    %480 = vmatprep.mubr.f32.mxu0 0.0
    %481 = vmatmul.mubr.f32.gmra.mxu0 %v415
    %v482 = vpop.f32.mrf.mxu0
    %v483 = vadd.f32 1e-05, %v482
    %v484 = vpop.f32.mrf.mxu0
    %485 = vdwg.mxu0
    %v486 = vrsqrt.pop %v483
    %487 = vmatprep.subr.mxu0 0.0
    %488 = vmatpush1.msra.mxu0 %v273
    %489 = vmatprep.subr.mxu0 0.0
    %490 = vmatpush1.msra.mxu0 %v272
    %491 = vmatprep.subr.mxu0 0.0
    %492 = vmatpush1.msra.mxu0 %v271
    %493 = vmatprep.subr.mxu0 0.0
    %494 = vmatpush1.msra.mxu0 %v270
    %495 = vmatprep.subr.mxu0 0.0
    %496 = vmatpush1.msra.mxu0 %v269
    %497 = vmatprep.subr.mxu0 0.0
    %498 = vmatpush1.msra.mxu0 %v268
    %499 = vmatprep.subr.mxu0 0.0
    %500 = vmatpush1.msra.mxu0 %v267
    %501 = vmatprep.subr.mxu0 0.0
    %502 = vmatpush1.msra.mxu0 %v266
    %503 = vmatprep.subr.mxu0 0.0
    %504 = vmatpush1.msra.mxu0 %v265
    %505 = vmatprep.subr.mxu0 0.0
    %506 = vmatpush1.msra.mxu0 %v264
    %507 = vmatprep.subr.mxu0 0.0
    %508 = vmatpush1.msra.mxu0 %v263
    %509 = vmatprep.subr.mxu0 0.0
    %510 = vmatpush1.msra.mxu0 %v262
    %511 = vmatprep.subr.mxu0 0.0
    %512 = vmatpush1.msra.mxu0 %v261
    %513 = vmatprep.subr.mxu0 0.0
    %514 = vmatpush1.msra.mxu0 %v260
    %515 = vmatprep.subr.mxu0 0.0
    %516 = vmatpush1.msra.mxu0 %v259
    %517 = vmatprep.subr.mxu0 0.0
    %518 = vmatpush1.msra.mxu0 %v258
    %519 = vmatprep.subr.mxu0 0.0
    %520 = vmatpush2.msra.mxu0 0.0
    %521 = vmatprep.subr.mxu0 0.0
    %522 = vmatpush2.msra.mxu0 0.0
    %523 = vmatprep.subr.mxu0 0.0
    %524 = vmatpush2.msra.mxu0 0.0
    %525 = vmatprep.subr.mxu0 0.0
    %526 = vmatpush2.msra.mxu0 0.0
    %527 = vmatprep.subr.mxu0 0.0
    %528 = vmatpush2.msra.mxu0 0.0
    %529 = vmatprep.subr.mxu0 0.0
    %530 = vmatpush2.msra.mxu0 0.0
    %531 = vmatprep.subr.mxu0 0.0
    %532 = vmatpush2.msra.mxu0 0.0
    %533 = vmatprep.subr.mxu0 0.0
    %534 = vmatpush2.msra.mxu0 0.0
    %535 = vmatprep.subr.mxu0 0.0
    %536 = vmatpush2.msra.mxu0 0.0
    %537 = vmatprep.subr.mxu0 0.0
    %538 = vmatpush2.msra.mxu0 0.0
    %539 = vmatprep.subr.mxu0 0.0
    %540 = vmatpush2.msra.mxu0 0.0
    %541 = vmatprep.subr.mxu0 0.0
    %542 = vmatpush2.msra.mxu0 0.0
    %543 = vmatprep.subr.mxu0 0.0
    %544 = vmatpush2.msra.mxu0 0.0
    %545 = vmatprep.subr.mxu0 0.0
    %546 = vmatpush2.msra.mxu0 0.0
    %547 = vmatprep.subr.mxu0 0.0
    %548 = vmatpush2.msra.mxu0 0.0
    %549 = vmatprep.subr.mxu0 0.0
    %550 = vmatpush2.msra.mxu0 0.0
    %551 = vmatprep.mubr.f32.mxu0 0.0
    %552 = vmatmul.mubr.f32.gmra.mxu0 %v486
    %v553 = vpop.f32.mrf.mxu0
    %v554 = vadd.f32 0.0, %v553
    %v555 = vpop.f32.mrf.mxu0
    %556 = vdwg.mxu0
    %v557 = vmul.f32 %v414, %v554
    %v558 = vld [vmem:[#allocation7] sm:$0x1]
    %v560 = vlaneseq
    %v561 = vshrl.u32 %v560, 7
    %v562 = vsub.s32 0, %v561
    %v563 = vrot.slane %v558, %v562
    %v565 = vmul.f32 %v557, %v563
    %v566 = vld [vmem:[#allocation8] sm:$0x1]
    %v568 = vlaneseq
    %v569 = vshrl.u32 %v568, 7
    %v570 = vsub.s32 0, %v569
    %v571 = vrot.slane %v566, %v570
    %v573 = vadd.f32 %v565, %v571
    %v574 = vmax.f32 %v573, 0.0
    %v575 = vld [vmem:[#allocation10] sm:$0x1f]
    %v576 = vld [vmem:[%s5] sm:$0x1f]
    %v577 = vlaneseq
    %v578 = vshrl.u32 %v577, 7
    %v579 = vsub.s32 0, %v578
    %v580 = vrot.slane %v575, %v579
    %v581 = vmul.f32 %v574, %v580
    %v582 = vmax.f32 %v581, -10.0
    %v583 = vmin.f32 %v582, 10.0
    %v584 = vand.u32 2147483647, %v583
    %vm585 = vcmp.le.f32.partialorder %v584, 0.7853982
    %vm586 = vcmp.lt.s32.totalorder %v583, 0
    %v587 = vand.u32 %v583, 2139095040
    %v588 = vshrl.u32 %v587, 23
    %v589 = vsub.s32 %v588, 127
    %v590 = vand.u32 2147483647, %v583
    %v591 = vand.u32 %v590, 8388607
    %v592 = vor.u32 %v591, 8388608
    %v593 = vsub.s32 0, %v592
    %v594 = vadd.s32 %v589, 1
    %vm595 = vcmp.gt.s32.totalorder %v594, 0
    %v596 = vsel %vm595, %v594, 0
    %v597 = vshrl.u32 %v596, 5
    %v598 = vand.u32 %v596, 31
    %v599 = vsub.s32 32, %v598
    %v600 = vshrl.u32 683565275, %v599
    %v601 = vshll.u32 683565275, %v598
    %v602 = vshrl.u32 2475754826, %v599
    %v603 = vor.u32 %v601, %v602
    %v604 = vshll.u32 2475754826, %v598
    %v605 = vshrl.u32 2131351028, %v599
    %v606 = vor.u32 %v604, %v605
    %v607 = vshll.u32 2131351028, %v598
    %v608 = vshrl.u32 2102212464, %v599
    %v609 = vor.u32 %v607, %v608
    %v610 = vshll.u32 2102212464, %v598
    %v611 = vshrl.u32 920167782, %v599
    %v612 = vor.u32 %v610, %v611
    %v613 = vshll.u32 920167782, %v598
    %v614 = vshrl.u32 1326507024, %v599
    %v615 = vor.u32 %v613, %v614
    %vm616 = vcmp.lt.s32.totalorder %v597, 1
    %vm617 = vcmp.lt.s32.totalorder %v597, 2
    %vm618 = vcmp.lt.s32.totalorder %v597, 3
    %vm619 = vcmp.lt.s32.totalorder %v597, 4
    %v620 = vsel %vm616, %v600, %v603
    %v621 = vsel %vm619, %v609, 2102212464
    %v622 = vsel %vm618, %v606, %v621
    %v623 = vsel %vm617, %v620, %v622
    %v624 = vsel %vm616, %v603, %v606
    %v625 = vsel %vm619, %v612, 920167782
    %v626 = vsel %vm618, %v609, %v625
    %v627 = vsel %vm617, %v624, %v626
    %v628 = vsel %vm616, %v606, %v609
    %v629 = vsel %vm619, %v615, 1326507024
    %v630 = vsel %vm618, %v612, %v629
    %v631 = vsel %vm617, %v628, %v630
    %v632 = vshll.u32 %v592, 8
    %v633 = vmul.u32.u64.compose %v632, %v631
    %v634 = vextract.low.u32 %v633
    %v635 = vextract.high.u32 %v633
    %v636 = vmul.u32.u64.compose %v632, %v627
    %v637 = vextract.low.u32 %v636
    %v638 = vextract.high.u32 %v636
    %v639 = vmul.u32 %v632, %v623
    %v640 = vadd.s32 %v635, %v637
    %vm641 = vc.u32 %v635, %v637
    %v642 = vadd.s32 %v638, 1
    %v643 = vsel %vm641, %v642, %v638
    %v644 = vadd.s32 %v639, %v643
    %v645 = vadd.s32 %v644, 536870912
    %v646 = vshrl.u32 %v645, 30
    %v647 = vshll.u32 %v646, 30
    %v648 = vsub.s32 %v644, %v647
    %vm649 = vcmp.lt.s32.totalorder %v648, 0
    %v650 = vsub.s32 0, %v648
    %v651 = vsel %vm649, %v650, %v648
    %v652 = vclz %v651
    %v653 = vsub.s32 %v652, 2
    %vm654 = vcmp.gt.s32.totalorder 0, %v653
    %v655 = vsel %vm654, 0, %v653
    %v656 = vsub.s32 32, %v655
    %v657 = vshll.u32 %v648, %v655
    %v658 = vshrl.u32 %v640, %v656
    %v659 = vor.u32 %v657, %v658
    %v660 = vsub.s32 4294967266, %v655
    %v661 = vadd.s32 %v660, 127
    %v662 = vshll.u32 %v661, 23
    %v663 = vor.u32 4788187, %v662
    %v664 = vand.u32 2147483647, %v663
    %v666 = vcvt.s32.f32 %v659
    %v667 = vmul.f32 %v666, %v664
    %v668 = vxor.u32 %v667, 2147483648
    %v669 = vsel %vm586, %v668, %v667
    %v670 = vsub.s32 4, %v646
    %v671 = vsel %vm586, %v670, %v646
    %v672 = vsel %vm585, %v583, %v669
    %v673 = vsel %vm585, 0, %v671
    %v674 = vcosq.f32.pop %v672
    %v675 = vsinq.f32.pop %v672
    %vm676 = vweird.f32 %v583
    %v677 = vadd.s32 %v673, 3
    %v678 = vand.u32 %v677, 3
    %vm679 = vcmp.lt.s32.totalorder %v678, 2
    %vm680 = vcmp.eq.s32.totalorder %v678, 0
    %v681 = vxor.u32 %v675, 2147483648
    %v682 = vsel %vm680, %v674, %v681
    %vm683 = vcmp.eq.s32.totalorder %v678, 2
    %v684 = vxor.u32 %v674, 2147483648
    %v685 = vsel %vm683, %v684, %v675
    %v686 = vsel %vm679, %v682, %v685
    %v687 = vsel %vm676, nan, %v686
    %v688 = vlaneseq
    %v689 = vshrl.u32 %v688, 7
    %v690 = vsub.s32 0, %v689
    %v691 = vrot.slane %v576, %v690
    %v692 = vmul.f32 %v691, %v687
    %v693 = vadd.f32 %v692, 0.0
    %v694 = vlaneseq
    %v695 = vshrl.u32 %v694, 7
    %v696 = vsub.s32 1, %v695
    %v697 = vrot.slane %v575, %v696
    %v698 = vmul.f32 %v574, %v697
    %v699 = vmax.f32 %v698, -10.0
    %v700 = vmin.f32 %v699, 10.0
    %v701 = vand.u32 2147483647, %v700
    %vm702 = vcmp.le.f32.partialorder %v701, 0.7853982
    %vm703 = vcmp.lt.s32.totalorder %v700, 0
    %v704 = vand.u32 %v700, 2139095040
    %v705 = vshrl.u32 %v704, 23
    %v706 = vsub.s32 %v705, 127
    %v707 = vand.u32 2147483647, %v700
    %v708 = vand.u32 %v707, 8388607
    %v709 = vor.u32 %v708, 8388608
    %v710 = vsub.s32 0, %v709
    %v711 = vadd.s32 %v706, 1
    %vm712 = vcmp.gt.s32.totalorder %v711, 0
    %v713 = vsel %vm712, %v711, 0
    %v714 = vshrl.u32 %v713, 5
    %v715 = vand.u32 %v713, 31
    %v716 = vsub.s32 32, %v715
    %v717 = vshrl.u32 683565275, %v716
    %v718 = vshll.u32 683565275, %v715
    %v719 = vshrl.u32 2475754826, %v716
    %v720 = vor.u32 %v718, %v719
    %v721 = vshll.u32 2475754826, %v715
    %v722 = vshrl.u32 2131351028, %v716
    %v723 = vor.u32 %v721, %v722
    %v724 = vshll.u32 2131351028, %v715
    %v725 = vshrl.u32 2102212464, %v716
    %v726 = vor.u32 %v724, %v725
    %v727 = vshll.u32 2102212464, %v715
    %v728 = vshrl.u32 920167782, %v716
    %v729 = vor.u32 %v727, %v728
    %v730 = vshll.u32 920167782, %v715
    %v731 = vshrl.u32 1326507024, %v716
    %v732 = vor.u32 %v730, %v731
    %vm733 = vcmp.lt.s32.totalorder %v714, 1
    %vm734 = vcmp.lt.s32.totalorder %v714, 2
    %vm735 = vcmp.lt.s32.totalorder %v714, 3
    %vm736 = vcmp.lt.s32.totalorder %v714, 4
    %v737 = vsel %vm733, %v717, %v720
    %v738 = vsel %vm736, %v726, 2102212464
    %v739 = vsel %vm735, %v723, %v738
    %v740 = vsel %vm734, %v737, %v739
    %v741 = vsel %vm733, %v720, %v723
    %v742 = vsel %vm736, %v729, 920167782
    %v743 = vsel %vm735, %v726, %v742
    %v744 = vsel %vm734, %v741, %v743
    %v745 = vsel %vm733, %v723, %v726
    %v746 = vsel %vm736, %v732, 1326507024
    %v747 = vsel %vm735, %v729, %v746
    %v748 = vsel %vm734, %v745, %v747
    %v749 = vshll.u32 %v709, 8
    %v750 = vmul.u32.u64.compose %v749, %v748
    %v751 = vextract.low.u32 %v750
    %v752 = vextract.high.u32 %v750
    %v753 = vmul.u32.u64.compose %v749, %v744
    %v754 = vextract.low.u32 %v753
    %v755 = vextract.high.u32 %v753
    %v756 = vmul.u32 %v749, %v740
    %v757 = vadd.s32 %v752, %v754
    %vm758 = vc.u32 %v752, %v754
    %v759 = vadd.s32 %v755, 1
    %v760 = vsel %vm758, %v759, %v755
    %v761 = vadd.s32 %v756, %v760
    %v762 = vadd.s32 %v761, 536870912
    %v763 = vshrl.u32 %v762, 30
    %v764 = vshll.u32 %v763, 30
    %v765 = vsub.s32 %v761, %v764
    %vm766 = vcmp.lt.s32.totalorder %v765, 0
    %v767 = vsub.s32 0, %v765
    %v768 = vsel %vm766, %v767, %v765
    %v769 = vclz %v768
    %v770 = vsub.s32 %v769, 2
    %vm771 = vcmp.gt.s32.totalorder 0, %v770
    %v772 = vsel %vm771, 0, %v770
    %v773 = vsub.s32 32, %v772
    %v774 = vshll.u32 %v765, %v772
    %v775 = vshrl.u32 %v757, %v773
    %v776 = vor.u32 %v774, %v775
    %v777 = vsub.s32 4294967266, %v772
    %v778 = vadd.s32 %v777, 127
    %v779 = vshll.u32 %v778, 23
    %v780 = vor.u32 4788187, %v779
    %v781 = vand.u32 2147483647, %v780
    %v783 = vcvt.s32.f32 %v776
    %v784 = vmul.f32 %v783, %v781
    %v785 = vxor.u32 %v784, 2147483648
    %v786 = vsel %vm703, %v785, %v784
    %v787 = vsub.s32 4, %v763
    %v788 = vsel %vm703, %v787, %v763
    %v789 = vsel %vm702, %v700, %v786
    %v790 = vsel %vm702, 0, %v788
    %v791 = vcosq.f32.pop %v789
    %v792 = vsinq.f32.pop %v789
    %vm793 = vweird.f32 %v700
    %v794 = vand.u32 %v790, 3
    %vm795 = vcmp.lt.s32.totalorder %v794, 2
    %vm796 = vcmp.eq.s32.totalorder %v794, 0
    %v797 = vxor.u32 %v792, 2147483648
    %v798 = vsel %vm796, %v791, %v797
    %vm799 = vcmp.eq.s32.totalorder %v794, 2
    %v800 = vxor.u32 %v791, 2147483648
    %v801 = vsel %vm799, %v800, %v792
    %v802 = vsel %vm795, %v798, %v801
    %v803 = vsel %vm793, nan, %v802
    %v804 = vlaneseq
    %v805 = vshrl.u32 %v804, 7
    %v806 = vsub.s32 1, %v805
    %v807 = vrot.slane %v576, %v806
    %v808 = vmul.f32 %v807, %v803
    %v809 = vadd.f32 %v693, %v808
    %v810 = vlaneseq
    %v811 = vshrl.u32 %v810, 7
    %v812 = vsub.s32 2, %v811
    %v813 = vrot.slane %v575, %v812
    %v814 = vmul.f32 %v574, %v813
    %v815 = vmax.f32 %v814, -10.0
    %v816 = vmin.f32 %v815, 10.0
    %v817 = vtanh.pop %v816
    %v818 = vlaneseq
    %v819 = vshrl.u32 %v818, 7
    %v820 = vsub.s32 2, %v819
    %v821 = vrot.slane %v576, %v820
    %v822 = vmul.f32 %v821, %v817
    %v823 = vadd.f32 %v809, %v822
    %v824 = vlaneseq
    %v825 = vshrl.u32 %v824, 7
    %v826 = vsub.s32 3, %v825
    %v827 = vrot.slane %v575, %v826
    %v828 = vmul.f32 %v574, %v827
    %v829 = vmax.f32 %v828, -10.0
    %v830 = vmin.f32 %v829, 10.0
    %v831 = vxor.u32 %v830, 2147483648
    %v832 = vmul.f32 %v831, 1.442695
    %v833 = vpow.pop %v832
    %v834 = vadd.f32 %v833, 1.0
    %v835 = vrcp.pop %v834
    %v836 = vmul.f32 1.0, %v835
    %v837 = vmul.f32 %v830, %v836
    %v838 = vlaneseq
    %v839 = vshrl.u32 %v838, 7
    %v840 = vsub.s32 3, %v839
    %v841 = vrot.slane %v576, %v840
    %v842 = vmul.f32 %v841, %v837
    %v843 = vadd.f32 %v823, %v842
    %v844 = vlaneseq
    %v845 = vshrl.u32 %v844, 7
    %v846 = vsub.s32 4, %v845
    %v847 = vrot.slane %v575, %v846
    %v848 = vmul.f32 %v574, %v847
    %v849 = vmax.f32 %v848, -10.0
    %v850 = vmin.f32 %v849, 10.0
    %v851 = vmax.f32 %v850, 0.0
    %v852 = vmin.f32 %v851, 6.0
    %v853 = vlaneseq
    %v854 = vshrl.u32 %v853, 7
    %v855 = vsub.s32 4, %v854
    %v856 = vrot.slane %v576, %v855
    %v857 = vmul.f32 %v856, %v852
    %v858 = vadd.f32 %v843, %v857
    %v859 = vld [vmem:[#allocation14] sm:$0xff]
    %v860 = vld [vmem:[#allocation14 + $0x8] sm:$0xff]
    %v861 = vld [vmem:[#allocation14 + $0x10] sm:$0xff]
    %v862 = vld [vmem:[#allocation14 + $0x18] sm:$0xff]
    %v863 = vld [vmem:[#allocation14 + $0x20] sm:$0xff]
    %v864 = vld [vmem:[#allocation14 + $0x28] sm:$0xff]
    %v865 = vld [vmem:[#allocation14 + $0x30] sm:$0xff]
    %v866 = vld [vmem:[#allocation14 + $0x38] sm:$0xff]
    %v867 = vld [vmem:[#allocation14 + $0x40] sm:$0xff]
    %v868 = vld [vmem:[#allocation14 + $0x48] sm:$0xff]
    %v869 = vld [vmem:[#allocation14 + $0x50] sm:$0xff]
    %v870 = vld [vmem:[#allocation14 + $0x58] sm:$0xff]
    %v871 = vld [vmem:[#allocation14 + $0x60] sm:$0xff]
    %v872 = vld [vmem:[#allocation14 + $0x68] sm:$0xff]
    %v873 = vld [vmem:[#allocation14 + $0x70] sm:$0xff]
    %v874 = vld [vmem:[#allocation14 + $0x78] sm:$0xff]
    %v875 = vld [vmem:[%s10] sm:$0x1]
    %v877 = vlaneseq
    %v878 = vshrl.u32 %v877, 7
    %v879 = vsub.s32 0, %v878
    %v880 = vrot.slane %v875, %v879
    %882 = vmatprep.subr.mxu0 0.0
    %883 = vmatpush1.msra.mxu0 %v874
    %884 = vmatprep.subr.mxu0 0.0
    %885 = vmatpush1.msra.mxu0 %v873
    %886 = vmatprep.subr.mxu0 0.0
    %887 = vmatpush1.msra.mxu0 %v872
    %888 = vmatprep.subr.mxu0 0.0
    %889 = vmatpush1.msra.mxu0 %v871
    %890 = vmatprep.subr.mxu0 0.0
    %891 = vmatpush1.msra.mxu0 %v870
    %892 = vmatprep.subr.mxu0 0.0
    %893 = vmatpush1.msra.mxu0 %v869
    %894 = vmatprep.subr.mxu0 0.0
    %895 = vmatpush1.msra.mxu0 %v868
    %896 = vmatprep.subr.mxu0 0.0
    %897 = vmatpush1.msra.mxu0 %v867
    %898 = vmatprep.subr.mxu0 0.0
    %899 = vmatpush1.msra.mxu0 %v866
    %900 = vmatprep.subr.mxu0 0.0
    %901 = vmatpush1.msra.mxu0 %v865
    %902 = vmatprep.subr.mxu0 0.0
    %903 = vmatpush1.msra.mxu0 %v864
    %904 = vmatprep.subr.mxu0 0.0
    %905 = vmatpush1.msra.mxu0 %v863
    %906 = vmatprep.subr.mxu0 0.0
    %907 = vmatpush1.msra.mxu0 %v862
    %908 = vmatprep.subr.mxu0 0.0
    %909 = vmatpush1.msra.mxu0 %v861
    %910 = vmatprep.subr.mxu0 0.0
    %911 = vmatpush1.msra.mxu0 %v860
    %912 = vmatprep.subr.mxu0 0.0
    %913 = vmatpush1.msra.mxu0 %v859
    %914 = vmatprep.subr.mxu0 0.0
    %915 = vmatpush2.msra.mxu0 0.0
    %916 = vmatprep.subr.mxu0 0.0
    %917 = vmatpush2.msra.mxu0 0.0
    %918 = vmatprep.subr.mxu0 0.0
    %919 = vmatpush2.msra.mxu0 0.0
    %920 = vmatprep.subr.mxu0 0.0
    %921 = vmatpush2.msra.mxu0 0.0
    %922 = vmatprep.subr.mxu0 0.0
    %923 = vmatpush2.msra.mxu0 0.0
    %924 = vmatprep.subr.mxu0 0.0
    %925 = vmatpush2.msra.mxu0 0.0
    %926 = vmatprep.subr.mxu0 0.0
    %927 = vmatpush2.msra.mxu0 0.0
    %928 = vmatprep.subr.mxu0 0.0
    %929 = vmatpush2.msra.mxu0 0.0
    %930 = vmatprep.subr.mxu0 0.0
    %931 = vmatpush2.msra.mxu0 0.0
    %932 = vmatprep.subr.mxu0 0.0
    %933 = vmatpush2.msra.mxu0 0.0
    %934 = vmatprep.subr.mxu0 0.0
    %935 = vmatpush2.msra.mxu0 0.0
    %936 = vmatprep.subr.mxu0 0.0
    %937 = vmatpush2.msra.mxu0 0.0
    %938 = vmatprep.subr.mxu0 0.0
    %939 = vmatpush2.msra.mxu0 0.0
    %940 = vmatprep.subr.mxu0 0.0
    %941 = vmatpush2.msra.mxu0 0.0
    %942 = vmatprep.subr.mxu0 0.0
    %943 = vmatpush2.msra.mxu0 0.0
    %944 = vmatprep.subr.mxu0 0.0
    %945 = vmatpush2.msra.mxu0 0.0
    %946 = vmatprep.mubr.f32.mxu0 0.0
    %947 = vmatmul.mubr.f32.gmra.mxu0 %v858
    %v948 = vpop.f32.mrf.mxu0
    %v949 = vadd.f32 %v880, %v948
    %v950 = vpop.f32.mrf.mxu0
    %951 = vdwg.mxu0
    %v952 = vmax.f32 %v949, -100.0
    %v953 = vmin.f32 %v952, 100.0
    %v954 = vld [vmem:[#allocation16] sm:$0xff]
    %v955 = vld [vmem:[#allocation16 + $0x8] sm:$0xff]
    %v956 = vld [vmem:[#allocation16 + $0x10] sm:$0xff]
    %v957 = vld [vmem:[#allocation16 + $0x18] sm:$0xff]
    %v958 = vld [vmem:[#allocation16 + $0x20] sm:$0xff]
    %v959 = vld [vmem:[#allocation16 + $0x28] sm:$0xff]
    %v960 = vld [vmem:[#allocation16 + $0x30] sm:$0xff]
    %v961 = vld [vmem:[#allocation16 + $0x38] sm:$0xff]
    %v962 = vld [vmem:[#allocation16 + $0x40] sm:$0xff]
    %v963 = vld [vmem:[#allocation16 + $0x48] sm:$0xff]
    %v964 = vld [vmem:[#allocation16 + $0x50] sm:$0xff]
    %v965 = vld [vmem:[#allocation16 + $0x58] sm:$0xff]
    %v966 = vld [vmem:[#allocation16 + $0x60] sm:$0xff]
    %v967 = vld [vmem:[#allocation16 + $0x68] sm:$0xff]
    %v968 = vld [vmem:[#allocation16 + $0x70] sm:$0xff]
    %v969 = vld [vmem:[#allocation16 + $0x78] sm:$0xff]
    %970 = vmatprep.subr.mxu0 0.0
    %971 = vmatpush1.msra.mxu0 %v969
    %972 = vmatprep.subr.mxu0 0.0
    %973 = vmatpush1.msra.mxu0 %v968
    %974 = vmatprep.subr.mxu0 0.0
    %975 = vmatpush1.msra.mxu0 %v967
    %976 = vmatprep.subr.mxu0 0.0
    %977 = vmatpush1.msra.mxu0 %v966
    %978 = vmatprep.subr.mxu0 0.0
    %979 = vmatpush1.msra.mxu0 %v965
    %980 = vmatprep.subr.mxu0 0.0
    %981 = vmatpush1.msra.mxu0 %v964
    %982 = vmatprep.subr.mxu0 0.0
    %983 = vmatpush1.msra.mxu0 %v963
    %984 = vmatprep.subr.mxu0 0.0
    %985 = vmatpush1.msra.mxu0 %v962
    %986 = vmatprep.subr.mxu0 0.0
    %987 = vmatpush1.msra.mxu0 %v961
    %988 = vmatprep.subr.mxu0 0.0
    %989 = vmatpush1.msra.mxu0 %v960
    %990 = vmatprep.subr.mxu0 0.0
    %991 = vmatpush1.msra.mxu0 %v959
    %992 = vmatprep.subr.mxu0 0.0
    %993 = vmatpush1.msra.mxu0 %v958
    %994 = vmatprep.subr.mxu0 0.0
    %995 = vmatpush1.msra.mxu0 %v957
    %996 = vmatprep.subr.mxu0 0.0
    %997 = vmatpush1.msra.mxu0 %v956
    %998 = vmatprep.subr.mxu0 0.0
    %999 = vmatpush1.msra.mxu0 %v955
    %1000 = vmatprep.subr.mxu0 0.0
    %1001 = vmatpush1.msra.mxu0 %v954
    %1002 = vmatprep.subr.mxu0 0.0
    %1003 = vmatpush2.msra.mxu0 0.0
    %1004 = vmatprep.subr.mxu0 0.0
    %1005 = vmatpush2.msra.mxu0 0.0
    %1006 = vmatprep.subr.mxu0 0.0
    %1007 = vmatpush2.msra.mxu0 0.0
    %1008 = vmatprep.subr.mxu0 0.0
    %1009 = vmatpush2.msra.mxu0 0.0
    %1010 = vmatprep.subr.mxu0 0.0
    %1011 = vmatpush2.msra.mxu0 0.0
    %1012 = vmatprep.subr.mxu0 0.0
    %1013 = vmatpush2.msra.mxu0 0.0
    %1014 = vmatprep.subr.mxu0 0.0
    %1015 = vmatpush2.msra.mxu0 0.0
    %1016 = vmatprep.subr.mxu0 0.0
    %1017 = vmatpush2.msra.mxu0 0.0
    %1018 = vmatprep.subr.mxu0 0.0
    %1019 = vmatpush2.msra.mxu0 0.0
    %1020 = vmatprep.subr.mxu0 0.0
    %1021 = vmatpush2.msra.mxu0 0.0
    %1022 = vmatprep.subr.mxu0 0.0
    %1023 = vmatpush2.msra.mxu0 0.0
    %1024 = vmatprep.subr.mxu0 0.0
    %1025 = vmatpush2.msra.mxu0 0.0
    %1026 = vmatprep.subr.mxu0 0.0
    %1027 = vmatpush2.msra.mxu0 0.0
    %1028 = vmatprep.subr.mxu0 0.0
    %1029 = vmatpush2.msra.mxu0 0.0
    %1030 = vmatprep.subr.mxu0 0.0
    %1031 = vmatpush2.msra.mxu0 0.0
    %1032 = vmatprep.subr.mxu0 0.0
    %1033 = vmatpush2.msra.mxu0 0.0
    %1034 = vmatprep.mubr.f32.mxu0 0.0
    %1035 = vmatmul.mubr.f32.gmra.mxu0 %v953
    %v1036 = vpop.f32.mrf.mxu0
    %v1037 = vadd.f32 0.0, %v1036
    %v1038 = vpop.f32.mrf.mxu0
    %1039 = vdwg.mxu0
    %v1040 = vmax.f32 %v1037, -100.0
    %v1041 = vmin.f32 %v1040, 100.0
    %1042 = vst [vmem:[#allocation17] sm:$0xff] %v1041
    // Predicated region
    $region86: #{tpu_custom_call.1} parent=1 // pred_check
      _
    $region87: #{tpu_custom_call.1} parent=1 // pred_check_branch
      %1044 = sbr.rel (0) target = $region89
    $region88: #{tpu_custom_call.1} parent=1 // pred_region
      %s1046 = ssub.s32 128, 128
      %1047 = vsyncadd [#allocation4], %s1046
      %s1049 = sshll.u32 [#allocation17], 4
      %s1050 = int_to_ptr.vmem [resolvable:$true] %s1049
      %1052 = dma.vmem_to_hbm [thread:$0]  %s1050, 128, %s12, [#allocation4]
    $region89: #{tpu_custom_call.1} parent=1 // pred_fallthru
      _
    // Predicated region
    $region90: #{tpu_custom_call.1} parent=1 // pred_check
      _
    $region91: #{tpu_custom_call.1} parent=1 // pred_check_branch
      %1054 = sbr.rel (0) target = $region93
    $region92: #{tpu_custom_call.1} parent=1 // pred_region
      %1055 = dma.done [#allocation4], 128
    $region93: #{tpu_custom_call.1} parent=1 // pred_fallthru
      _
    %1056 = vsyncpa [#allocation3], 1
    %1057 = vsyncpa [#allocation6], 1
    %1058 = vsyncpa [#allocation9], 1
    %1059 = vsyncpa [#allocation12], 1
    %1060 = vsyncpa [#allocation15], 1
    %1061 = vsyncpa [#allocation4], 1

</llo_original>
